<compile_context>
chip_gen: v7x
topology: tpu7x:2x2x1
jax: 0.10.0
libtpu: 0.0.40
codegen_flags: <defaults>
</compile_context>

<pallas_src>
import functools

import jax
import jax.numpy as jnp
from jax.experimental import pallas as pl
from jax.experimental.pallas import tpu as pltpu

EPS = 1e-5
_CPARAMS = pltpu.CompilerParams(dimension_semantics=("parallel",))


# ------------------------------ kernel bodies --------------------------------

def _build_act(x_ref, s_ref, b_ref, act_ref, ho, wo):
    # act = relu(x * scale + bias) written into a zero-initialised, left/top
    # (and, for stride 1, right/bottom) padded VMEM scratch.
    act_ref[...] = jnp.zeros_like(act_ref)
    a = x_ref[0].astype(jnp.float32) * s_ref[0, :] + b_ref[0, :]
    act_ref[1:1 + ho, :, 1:1 + wo, :] = jnp.maximum(a, 0.0).astype(act_ref.dtype)


def _conv_from_act(act_ref, w_ref, taps, ho, wo, cb):
    # Single im2col matmul: gather the tap slabs (all static contiguous slices),
    # concat along the contraction dim and do one MXU matmul (bf16 x bf16 -> f32).
    pieces = [act_ref[py:py + ho, rr, qx:qx + wo, :] for (py, rr, qx) in taps]
    patch = jnp.concatenate(pieces, axis=-1).reshape(ho * wo, len(taps) * cb)
    return jnp.dot(patch, w_ref[...], preferred_element_type=jnp.float32)


def _k_conv(x_ref, s_ref, b_ref, w_ref, o_ref, act_ref, *,
            taps, ho, wo, cb, c_out):
    _build_act(x_ref, s_ref, b_ref, act_ref, ho, wo)
    acc = _conv_from_act(act_ref, w_ref, taps, ho, wo, cb)
    o_ref[...] = acc.reshape(1, ho, wo, c_out).astype(o_ref.dtype)


def _k_conv_add(x_ref, s_ref, b_ref, w_ref, res_ref, o_ref, act_ref, *,
                taps, ho, wo, cb, c_out):
    _build_act(x_ref, s_ref, b_ref, act_ref, ho, wo)
    acc = _conv_from_act(act_ref, w_ref, taps, ho, wo, cb)
    o_ref[...] = (res_ref[...].astype(jnp.float32)
                  + acc.reshape(1, ho, wo, c_out)).astype(o_ref.dtype)


def _k_conv_shortcut(x_ref, s_ref, b_ref, w_ref, wsc_ref, o_ref, sc_ref, act_ref, *,
                     taps, ho, wo, cb, c_out):
    _build_act(x_ref, s_ref, b_ref, act_ref, ho, wo)
    acc = _conv_from_act(act_ref, w_ref, taps, ho, wo, cb)
    o_ref[...] = acc.reshape(1, ho, wo, c_out).astype(o_ref.dtype)
    # Fused 1x1 shortcut conv on the same activated input (stride folded into
    # the packed layout / weight matrix).
    sc_in = act_ref[1:1 + ho, 0, 1:1 + wo, :].reshape(ho * wo, cb)
    sc = jnp.dot(sc_in, wsc_ref[...], preferred_element_type=jnp.float32)
    sc_ref[...] = sc.reshape(1, ho, wo, c_out).astype(sc_ref.dtype)


# ------------------------------- call wrapper ---------------------------------

def _taps(stride):
    # (row-pair offset, row-in-pair, col-pair offset) per concat slab.
    if stride == 1:
        return tuple((ky, 0, kx) for ky in range(3) for kx in range(3))
    # stride 2: ky=0 -> (0,1), ky=1 -> (1,0), ky=2 -> (1,1); col pairs j-1 and j.
    return ((0, 1, 0), (0, 1, 1), (1, 0, 0), (1, 0, 1), (1, 1, 0), (1, 1, 1))


def fused_conv(x, scale, bias, w_mat, stride, *, residual=None, wsc_mat=None):
    """y = conv3x3(relu(scale*x+bias), stride, pad=1) [+ residual];
       optionally also returns conv1x1(relu(scale*x+bias), stride)."""
    n, h, w, c_in = x.shape
    c_out = w_mat.shape[-1]
    if stride == 1:
        ho, wo, r, cb = h, w, 1, c_in
    else:
        assert stride == 2 and h % 2 == 0 and w % 2 == 0
        ho, wo, r, cb = h // 2, w // 2, 2, 2 * c_in
    xp = x.reshape(n, ho, r, wo, cb)          # contiguous (free) reshape
    taps = _taps(stride)
    kdim = len(taps) * cb
    assert w_mat.shape == (kdim, c_out), (w_mat.shape, kdim, c_out)
    hs = ho + (2 if stride == 1 else 1)       # scratch pad rows
    ws = wo + (2 if stride == 1 else 1)       # scratch pad cols

    x_spec = pl.BlockSpec((1, ho, r, wo, cb), lambda i: (i, 0, 0, 0, 0))
    vec_spec = pl.BlockSpec((1, cb), lambda i: (0, 0))
    w_spec = pl.BlockSpec((kdim, c_out), lambda i: (0, 0))
    io_spec = pl.BlockSpec((1, ho, wo, c_out), lambda i: (i, 0, 0, 0))
    scratch = [pltpu.VMEM((hs, r, ws, cb), jnp.bfloat16)]
    static = dict(taps=taps, ho=ho, wo=wo, cb=cb, c_out=c_out)

    if wsc_mat is not None:
        kernel = functools.partial(_k_conv_shortcut, **static)
        in_specs = [x_spec, vec_spec, vec_spec, w_spec,
                    pl.BlockSpec((cb, c_out), lambda i: (0, 0))]
        args = (xp, scale, bias, w_mat, wsc_mat)
        out_shape = (jax.ShapeDtypeStruct((n, ho, wo, c_out), x.dtype),
                     jax.ShapeDtypeStruct((n, ho, wo, c_out), x.dtype))
        out_specs = (io_spec, io_spec)
    elif residual is not None:
        kernel = functools.partial(_k_conv_add, **static)
        in_specs = [x_spec, vec_spec, vec_spec, w_spec, io_spec]
        args = (xp, scale, bias, w_mat, residual)
        out_shape = jax.ShapeDtypeStruct((n, ho, wo, c_out), x.dtype)
        out_specs = io_spec
    else:
        kernel = functools.partial(_k_conv, **static)
        in_specs = [x_spec, vec_spec, vec_spec, w_spec]
        args = (xp, scale, bias, w_mat)
        out_shape = jax.ShapeDtypeStruct((n, ho, wo, c_out), x.dtype)
        out_specs = io_spec

    # TODO(synk): add output-row tiling (extra grid axis) + vmem_limit_bytes for
    # large images; whole-image blocks fit easily in VMEM at these sizes.
    return pl.pallas_call(
        kernel,
        out_shape=out_shape,
        grid=(n,),
        in_specs=in_specs,
        out_specs=out_specs,
        scratch_shapes=scratch,
        compiler_params=_CPARAMS,
    )(*args)


# ----------------------- one-time parameter preparation -----------------------

def _fold_bn(gamma, beta, mean, var):
    scale = gamma / jnp.sqrt(var + EPS)
    return scale, beta - mean * scale


def _pack_conv3x3_weights(w_hwio, stride):
    # Repack (3,3,Cin,Cout) -> (K, Cout) matching the in-kernel tap order.
    _, _, cin, cout = w_hwio.shape
    if stride == 1:
        return w_hwio.reshape(9 * cin, cout)
    z = jnp.zeros((cin, cout), w_hwio.dtype)
    blocks = []
    for ky in range(3):
        blocks.append(jnp.concatenate([z, w_hwio[ky, 0]], axis=0))              # col-pair j-1 (only col 2j-1)
        blocks.append(jnp.concatenate([w_hwio[ky, 1], w_hwio[ky, 2]], axis=0))  # col-pair j (cols 2j, 2j+1)
    return jnp.concatenate(blocks, axis=0)                                       # (12*Cin, Cout)


def prepare_basic_block(p, stride):
    """Fold BN and repack conv weights into kernel-ready bf16 matrices (once)."""
    s1, b1 = _fold_bn(p['bn1_gamma'], p['bn1_beta'], p['bn1_mean'], p['bn1_var'])
    s2, b2 = _fold_bn(p['bn2_gamma'], p['bn2_beta'], p['bn2_mean'], p['bn2_var'])
    w1 = jnp.transpose(p['conv1_w'], (2, 3, 1, 0)).astype(jnp.bfloat16)  # OIHW->HWIO
    w2 = jnp.transpose(p['conv2_w'], (2, 3, 1, 0)).astype(jnp.bfloat16)
    if stride == 2:                      # channels are pair-packed (2*Cin) for conv1
        s1, b1 = jnp.concatenate([s1, s1]), jnp.concatenate([b1, b1])
    prep = {
        's1': s1.reshape(1, -1), 'b1': b1.reshape(1, -1),
        's2': s2.reshape(1, -1), 'b2': b2.reshape(1, -1),
        'w1_mat': _pack_conv3x3_weights(w1, stride),
        'w2_mat': _pack_conv3x3_weights(w2, 1),
    }
    if 'convsc_w' in p:
        wsc = jnp.transpose(p['convsc_w'], (2, 3, 1, 0))[0, 0].astype(jnp.bfloat16)  # (Cin, Cout)
        if stride == 2:
            wsc = jnp.concatenate([wsc, jnp.zeros_like(wsc)], axis=0)  # only even cols used
        prep['wsc_mat'] = wsc
    return prep


# --------------------------- module forward (NetworkBlock) --------------------

def basic_block_forward(x, prep, stride):
    # x: NHWC. Pre-activation BasicBlock, inference semantics.
    if 'wsc_mat' in prep:
        h, res = fused_conv(x, prep['s1'], prep['b1'], prep['w1_mat'], stride,
                            wsc_mat=prep['wsc_mat'])
    else:
        assert stride == 1
        h = fused_conv(x, prep['s1'], prep['b1'], prep['w1_mat'], stride)
        res = x
    # TODO(synk): dropout omitted — dropRate=0.0 and identity in eval mode.
    return fused_conv(h, prep['s2'], prep['b2'], prep['w2_mat'], 1, residual=res)


def network_block_forward(x_nchw, prepared, stride):
    x = jnp.transpose(x_nchw, (0, 2, 3, 1))          # NCHW -> NHWC
    for i, prep in enumerate(prepared):
        x = basic_block_forward(x, prep, stride if i == 0 else 1)
    return jnp.transpose(x, (0, 3, 1, 2))            # NHWC -> NCHW


# ---------------------------------- parameters --------------------------------

def init_basic_block_params(key, in_planes, out_planes):
    ks = jax.random.split(key, 12)
    p = dict(
        bn1_gamma=1.0 + 0.1 * jax.random.normal(ks[0], (in_planes,), jnp.float32),
        bn1_beta=0.1 * jax.random.normal(ks[1], (in_planes,), jnp.float32),
        bn1_mean=0.1 * jax.random.normal(ks[2], (in_planes,), jnp.float32),
        bn1_var=0.5 + jnp.abs(jax.random.normal(ks[3], (in_planes,), jnp.float32)),
        conv1_w=0.1 * jax.random.normal(ks[4], (out_planes, in_planes, 3, 3), jnp.float32),
        bn2_gamma=1.0 + 0.1 * jax.random.normal(ks[5], (out_planes,), jnp.float32),
        bn2_beta=0.1 * jax.random.normal(ks[6], (out_planes,), jnp.float32),
        bn2_mean=0.1 * jax.random.normal(ks[7], (out_planes,), jnp.float32),
        bn2_var=0.5 + jnp.abs(jax.random.normal(ks[8], (out_planes,), jnp.float32)),
        conv2_w=0.1 * jax.random.normal(ks[9], (out_planes, out_planes, 3, 3), jnp.float32),
    )
    if in_planes != out_planes:
        p['convsc_w'] = 0.1 * jax.random.normal(
            ks[10], (out_planes, in_planes, 1, 1), jnp.float32)
    return p


# ------------------------------ pure-JAX reference ----------------------------

def _ref_conv(x, w, stride, pad):
    return jax.lax.conv_general_dilated(
        x, w, (stride, stride), [(pad, pad), (pad, pad)],
        dimension_numbers=('NCHW', 'OIHW', 'NCHW'),
        precision=jax.lax.Precision.HIGHEST)


def _ref_bn_relu(x, g, b, m, v):
    y = (x - m[None, :, None, None]) / jnp.sqrt(v[None, :, None, None] + EPS)
    return jax.nn.relu(g[None, :, None, None] * y + b[None, :, None, None])


def ref_network_block(x, params_list, stride):
    for i, p in enumerate(params_list):
        s = stride if i == 0 else 1
        in_p, out_p = p['conv1_w'].shape[1], p['conv1_w'].shape[0]
        a = _ref_bn_relu(x, p['bn1_gamma'], p['bn1_beta'], p['bn1_mean'], p['bn1_var'])
        h = _ref_conv(a, p['conv1_w'], s, 1)
        h2 = _ref_bn_relu(h, p['bn2_gamma'], p['bn2_beta'], p['bn2_mean'], p['bn2_var'])
        out = _ref_conv(h2, p['conv2_w'], 1, 1)
        res = x if in_p == out_p else _ref_conv(a, p['convsc_w'], s, 0)
        x = res + out
    return x


# ------------------------------------ main -------------------------------------

if __name__ == "__main__":
    key = jax.random.PRNGKey(0)
    nb_layers, in_planes, out_planes, stride = 2, 4, 8, 2
    N, H, W = 2, 16, 16

    k_x, k_p = jax.random.split(key)
    x_nchw = jax.random.normal(k_x, (N, in_planes, H, W), jnp.float32)

    layer_keys = jax.random.split(k_p, nb_layers)
    params = []
    for i in range(nb_layers):
        cin = in_planes if i == 0 else out_planes
        params.append(init_basic_block_params(layer_keys[i], cin, out_planes))

    prepared = [prepare_basic_block(params[i], stride if i == 0 else 1)
                for i in range(nb_layers)]

    out = network_block_forward(x_nchw, prepared, stride)
    out = jax.block_until_ready(out)

    ref = ref_network_block(x_nchw, params, stride)
    assert out.shape == ref.shape, (out.shape, ref.shape)
    # bf16 MXU operands (f32 accumulation) vs f32 HIGHEST reference -> loose tol.
    if not bool(jnp.allclose(out, ref, rtol=5e-2, atol=5e-2)):
        err = float(jnp.max(jnp.abs(out - ref)))
        raise RuntimeError(f"Pallas NetworkBlock mismatch vs reference (max abs err {err})")

    print("KERNEL_OK")
</pallas_src>

<mosaic_0001>
module attributes {stable_mosaic.version = 11 : i64} {
  func.func @_k_conv_shortcut(%arg0: i32, %arg1: memref<1x8x2x8x8xf32, #tpu.memory_space<vmem>>, %arg2: memref<1x8xf32, #tpu.memory_space<vmem>>, %arg3: memref<1x8xf32, #tpu.memory_space<vmem>>, %arg4: memref<48x8xbf16, #tpu.memory_space<vmem>>, %arg5: memref<8x8xbf16, #tpu.memory_space<vmem>>, %arg6: memref<1x8x8x8xf32, #tpu.memory_space<vmem>>, %arg7: memref<1x8x8x8xf32, #tpu.memory_space<vmem>>, %arg8: memref<9x2x9x8xbf16, #tpu.memory_space<vmem>>) attributes {dimension_semantics = [#tpu.dimension_semantics<parallel>], iteration_bounds = array<i64: 2>, scalar_prefetch = 0 : i64, scratch_operands = 1 : i64, tpu.core_type = #tpu.core_type<tc>, window_params = [{transform_indices = @transform_0, window_bounds = array<i64: 1, 8, 2, 8, 8>}, {pipeline_mode = #tpu.pipeline_mode<synchronous>, transform_indices = @transform_1, window_bounds = array<i64: 1, 8>}, {pipeline_mode = #tpu.pipeline_mode<synchronous>, transform_indices = @transform_2, window_bounds = array<i64: 1, 8>}, {pipeline_mode = #tpu.pipeline_mode<synchronous>, transform_indices = @transform_3, window_bounds = array<i64: 48, 8>}, {pipeline_mode = #tpu.pipeline_mode<synchronous>, transform_indices = @transform_4, window_bounds = array<i64: 8, 8>}, {transform_indices = @transform_5, window_bounds = array<i64: 1, 8, 8, 8>}, {transform_indices = @transform_6, window_bounds = array<i64: 1, 8, 8, 8>}]} {
    %cst = arith.constant 0.000000e+00 : bf16
    %0 = vector.broadcast %cst : bf16 to vector<9x2x9x8xbf16>
    %c0 = arith.constant 0 : index
    %c0_0 = arith.constant 0 : index
    %c0_1 = arith.constant 0 : index
    %c0_2 = arith.constant 0 : index
    %1 = vector.load %arg8[%c0, %c0_0, %c0_1, %c0_2] : memref<9x2x9x8xbf16, #tpu.memory_space<vmem>>, vector<9x2x9x8xbf16>
    tpu.vector_store %arg8[%c0, %c0_0, %c0_1, %c0_2], %0 {strides = array<i32>} : memref<9x2x9x8xbf16, #tpu.memory_space<vmem>>, vector<9x2x9x8xbf16>,
    %c0_3 = arith.constant 0 : index
    %c0_4 = arith.constant 0 : index
    %c0_5 = arith.constant 0 : index
    %c0_6 = arith.constant 0 : index
    %c0_7 = arith.constant 0 : index
    %2 = vector.load %arg1[%c0_3, %c0_4, %c0_5, %c0_6, %c0_7] : memref<1x8x2x8x8xf32, #tpu.memory_space<vmem>>, vector<1x8x2x8x8xf32>
    %3 = vector.shape_cast %2 : vector<1x8x2x8x8xf32> to vector<8x2x8x8xf32>
    %c0_8 = arith.constant 0 : index
    %c0_9 = arith.constant 0 : index
    %4 = vector.load %arg2[%c0_8, %c0_9] : memref<1x8xf32, #tpu.memory_space<vmem>>, vector<1x8xf32>
    %5 = vector.shape_cast %4 : vector<1x8xf32> to vector<8xf32>
    %6 = vector.shape_cast %5 : vector<8xf32> to vector<1x1x1x8xf32>
    %7 = vector.broadcast %6 : vector<1x1x1x8xf32> to vector<8x2x8x8xf32>
    %8 = arith.mulf %3, %7 : vector<8x2x8x8xf32>
    %c0_10 = arith.constant 0 : index
    %c0_11 = arith.constant 0 : index
    %9 = vector.load %arg3[%c0_10, %c0_11] : memref<1x8xf32, #tpu.memory_space<vmem>>, vector<1x8xf32>
    %10 = vector.shape_cast %9 : vector<1x8xf32> to vector<8xf32>
    %11 = vector.shape_cast %10 : vector<8xf32> to vector<1x1x1x8xf32>
    %12 = vector.broadcast %11 : vector<1x1x1x8xf32> to vector<8x2x8x8xf32>
    %13 = arith.addf %8, %12 : vector<8x2x8x8xf32>
    %cst_12 = arith.constant 0.000000e+00 : f32
    %14 = vector.broadcast %cst_12 : f32 to vector<8x2x8x8xf32>
    %15 = arith.maximumf %13, %14 : vector<8x2x8x8xf32>
    %16 = arith.truncf %15 : vector<8x2x8x8xf32> to vector<8x2x8x8xbf16>
    %c1 = arith.constant 1 : index
    %c0_13 = arith.constant 0 : index
    %c1_14 = arith.constant 1 : index
    %c0_15 = arith.constant 0 : index
    %17 = vector.load %arg8[%c1, %c0_13, %c1_14, %c0_15] : memref<9x2x9x8xbf16, #tpu.memory_space<vmem>>, vector<8x2x8x8xbf16>
    tpu.vector_store %arg8[%c1, %c0_13, %c1_14, %c0_15], %16 {strides = array<i32>} : memref<9x2x9x8xbf16, #tpu.memory_space<vmem>>, vector<8x2x8x8xbf16>,
    %c0_16 = arith.constant 0 : index
    %c1_17 = arith.constant 1 : index
    %c0_18 = arith.constant 0 : index
    %c0_19 = arith.constant 0 : index
    %18 = vector.load %arg8[%c0_16, %c1_17, %c0_18, %c0_19] : memref<9x2x9x8xbf16, #tpu.memory_space<vmem>>, vector<8x1x8x8xbf16>
    %19 = vector.shape_cast %18 : vector<8x1x8x8xbf16> to vector<8x8x8xbf16>
    %c0_20 = arith.constant 0 : index
    %c1_21 = arith.constant 1 : index
    %c1_22 = arith.constant 1 : index
    %c0_23 = arith.constant 0 : index
    %20 = vector.load %arg8[%c0_20, %c1_21, %c1_22, %c0_23] : memref<9x2x9x8xbf16, #tpu.memory_space<vmem>>, vector<8x1x8x8xbf16>
    %21 = vector.shape_cast %20 : vector<8x1x8x8xbf16> to vector<8x8x8xbf16>
    %c1_24 = arith.constant 1 : index
    %c0_25 = arith.constant 0 : index
    %c0_26 = arith.constant 0 : index
    %c0_27 = arith.constant 0 : index
    %22 = vector.load %arg8[%c1_24, %c0_25, %c0_26, %c0_27] : memref<9x2x9x8xbf16, #tpu.memory_space<vmem>>, vector<8x1x8x8xbf16>
    %23 = vector.shape_cast %22 : vector<8x1x8x8xbf16> to vector<8x8x8xbf16>
    %c1_28 = arith.constant 1 : index
    %c0_29 = arith.constant 0 : index
    %c1_30 = arith.constant 1 : index
    %c0_31 = arith.constant 0 : index
    %24 = vector.load %arg8[%c1_28, %c0_29, %c1_30, %c0_31] : memref<9x2x9x8xbf16, #tpu.memory_space<vmem>>, vector<8x1x8x8xbf16>
    %25 = vector.shape_cast %24 : vector<8x1x8x8xbf16> to vector<8x8x8xbf16>
    %c1_32 = arith.constant 1 : index
    %c1_33 = arith.constant 1 : index
    %c0_34 = arith.constant 0 : index
    %c0_35 = arith.constant 0 : index
    %26 = vector.load %arg8[%c1_32, %c1_33, %c0_34, %c0_35] : memref<9x2x9x8xbf16, #tpu.memory_space<vmem>>, vector<8x1x8x8xbf16>
    %27 = vector.shape_cast %26 : vector<8x1x8x8xbf16> to vector<8x8x8xbf16>
    %c1_36 = arith.constant 1 : index
    %c1_37 = arith.constant 1 : index
    %c1_38 = arith.constant 1 : index
    %c0_39 = arith.constant 0 : index
    %28 = vector.load %arg8[%c1_36, %c1_37, %c1_38, %c0_39] : memref<9x2x9x8xbf16, #tpu.memory_space<vmem>>, vector<8x1x8x8xbf16>
    %29 = vector.shape_cast %28 : vector<8x1x8x8xbf16> to vector<8x8x8xbf16>
    %30 = tpu.concatenate %19, %21, %23, %25, %27, %29 in 2 : vector<8x8x8xbf16>, vector<8x8x8xbf16>, vector<8x8x8xbf16>, vector<8x8x8xbf16>, vector<8x8x8xbf16>, vector<8x8x8xbf16> -> vector<8x8x48xbf16>
    %31 = vector.shape_cast %30 : vector<8x8x48xbf16> to vector<64x48xbf16>
    %c0_40 = arith.constant 0 : index
    %c0_41 = arith.constant 0 : index
    %32 = vector.load %arg4[%c0_40, %c0_41] : memref<48x8xbf16, #tpu.memory_space<vmem>>, vector<48x8xbf16>
    %cst_42 = arith.constant dense<0.000000e+00> : vector<64x8xf32>
    %33 = tpu.matmul %31, %32, %cst_42 {dimension_numbers = #tpu.dot_dimension_numbers<[1], [0], [0], [1], [0, 0, 1, 1], [], []>} : vector<64x48xbf16>, vector<48x8xbf16>, vector<64x8xf32> -> vector<64x8xf32>
    %34 = vector.shape_cast %33 : vector<64x8xf32> to vector<1x8x8x8xf32>
    %c0_43 = arith.constant 0 : index
    %c0_44 = arith.constant 0 : index
    %c0_45 = arith.constant 0 : index
    %c0_46 = arith.constant 0 : index
    %35 = vector.load %arg6[%c0_43, %c0_44, %c0_45, %c0_46] : memref<1x8x8x8xf32, #tpu.memory_space<vmem>>, vector<1x8x8x8xf32>
    tpu.vector_store %arg6[%c0_43, %c0_44, %c0_45, %c0_46], %34 {strides = array<i32>} : memref<1x8x8x8xf32, #tpu.memory_space<vmem>>, vector<1x8x8x8xf32>,
    %c1_47 = arith.constant 1 : index
    %c0_48 = arith.constant 0 : index
    %c1_49 = arith.constant 1 : index
    %c0_50 = arith.constant 0 : index
    %36 = vector.load %arg8[%c1_47, %c0_48, %c1_49, %c0_50] : memref<9x2x9x8xbf16, #tpu.memory_space<vmem>>, vector<8x1x8x8xbf16>
    %37 = vector.shape_cast %36 : vector<8x1x8x8xbf16> to vector<8x8x8xbf16>
    %38 = vector.shape_cast %37 : vector<8x8x8xbf16> to vector<64x8xbf16>
    %c0_51 = arith.constant 0 : index
    %c0_52 = arith.constant 0 : index
    %39 = vector.load %arg5[%c0_51, %c0_52] : memref<8x8xbf16, #tpu.memory_space<vmem>>, vector<8x8xbf16>
    %cst_53 = arith.constant dense<0.000000e+00> : vector<64x8xf32>
    %40 = tpu.matmul %38, %39, %cst_53 {dimension_numbers = #tpu.dot_dimension_numbers<[1], [0], [0], [1], [0, 0, 1, 1], [], []>} : vector<64x8xbf16>, vector<8x8xbf16>, vector<64x8xf32> -> vector<64x8xf32>
    %41 = vector.shape_cast %40 : vector<64x8xf32> to vector<1x8x8x8xf32>
    %c0_54 = arith.constant 0 : index
    %c0_55 = arith.constant 0 : index
    %c0_56 = arith.constant 0 : index
    %c0_57 = arith.constant 0 : index
    %42 = vector.load %arg7[%c0_54, %c0_55, %c0_56, %c0_57] : memref<1x8x8x8xf32, #tpu.memory_space<vmem>>, vector<1x8x8x8xf32>
    tpu.vector_store %arg7[%c0_54, %c0_55, %c0_56, %c0_57], %41 {strides = array<i32>} : memref<1x8x8x8xf32, #tpu.memory_space<vmem>>, vector<1x8x8x8xf32>,
    return
  }
  func.func @transform_0(%arg0: i32) -> (i32, i32, i32, i32, i32) {
    %c0_i32 = arith.constant 0 : i32
    %c0_i32_0 = arith.constant 0 : i32
    %c0_i32_1 = arith.constant 0 : i32
    %c0_i32_2 = arith.constant 0 : i32
    %c0_i32_3 = arith.constant 0 : i32
    return %arg0, %c0_i32, %c0_i32_0, %c0_i32_1, %c0_i32_2 : i32, i32, i32, i32, i32
  }
  func.func @transform_1(%arg0: i32) -> (i32, i32) {
    %c0_i32 = arith.constant 0 : i32
    %c0_i32_0 = arith.constant 0 : i32
    %c0_i32_1 = arith.constant 0 : i32
    return %c0_i32, %c0_i32_0 : i32, i32
  }
  func.func @transform_2(%arg0: i32) -> (i32, i32) {
    %c0_i32 = arith.constant 0 : i32
    %c0_i32_0 = arith.constant 0 : i32
    %c0_i32_1 = arith.constant 0 : i32
    return %c0_i32, %c0_i32_0 : i32, i32
  }
  func.func @transform_3(%arg0: i32) -> (i32, i32) {
    %c0_i32 = arith.constant 0 : i32
    %c0_i32_0 = arith.constant 0 : i32
    %c0_i32_1 = arith.constant 0 : i32
    return %c0_i32, %c0_i32_0 : i32, i32
  }
  func.func @transform_4(%arg0: i32) -> (i32, i32) {
    %c0_i32 = arith.constant 0 : i32
    %c0_i32_0 = arith.constant 0 : i32
    %c0_i32_1 = arith.constant 0 : i32
    return %c0_i32, %c0_i32_0 : i32, i32
  }
  func.func @transform_5(%arg0: i32) -> (i32, i32, i32, i32) {
    %c0_i32 = arith.constant 0 : i32
    %c0_i32_0 = arith.constant 0 : i32
    %c0_i32_1 = arith.constant 0 : i32
    %c0_i32_2 = arith.constant 0 : i32
    return %arg0, %c0_i32, %c0_i32_0, %c0_i32_1 : i32, i32, i32, i32
  }
  func.func @transform_6(%arg0: i32) -> (i32, i32, i32, i32) {
    %c0_i32 = arith.constant 0 : i32
    %c0_i32_0 = arith.constant 0 : i32
    %c0_i32_1 = arith.constant 0 : i32
    %c0_i32_2 = arith.constant 0 : i32
    return %arg0, %c0_i32, %c0_i32_0, %c0_i32_1 : i32, i32, i32, i32
  }
}

</mosaic_0001>

<llo_original>
// kernel: tpu_custom_call.1
$region0: #{tpu_custom_call.1}
  #allocation0 [shape = 'u32[]', space=smem, size = 0x4, offset = 0x4, fixed_abs, tag = 'smem constant byte address 0x4 - core index']
  #allocation1 [shape = 'u32[144,128]{1,0:T(1,128)}', space=vmem, size = 0x12000, scoped, tag = 'internal scratch']
  #allocation2 [shape = 'bf16[9,2,9,8]{3,2,1,0:T(8,128)(2,1)}', space=vmem, size = 0x12000, scoped, tag = 'scratch operand']
  %s0 = inlined_call_operand.hbm [shape: f32[2,8,2,8,8], index: 0, kind: input, shape index: {}]
  %s1 = inlined_call_operand.vmem [shape: f32[1,8], index: 1, kind: input, shape index: {}]
  %s2 = inlined_call_operand.vmem [shape: f32[1,8], index: 2, kind: input, shape index: {}]
  %s3 = inlined_call_operand.vmem [shape: bf16[48,8], index: 3, kind: input, shape index: {}]
  %s4 = inlined_call_operand.vmem [shape: bf16[8,8], index: 4, kind: input, shape index: {}]
  %s5 = inlined_call_operand.hbm [shape: f32[2,8,8,8], index: 5, kind: output, shape index: {0}]
  %s6 = inlined_call_operand.hbm [shape: f32[2,8,8,8], index: 6, kind: output, shape index: {1}]
  %7 = xla_tuple %s5, %s6
  %s8 = sld [smem:[#allocation0]]
  $region65: #{tpu_custom_call.1} parent=0
    _
  %s10 = ssub.s32 1, %s8
  %s11 = scalar_select 0, %s10, %s8
  $region1: #{tpu_custom_call.1} parent=0
    #allocation3 [shape = 'u8[131072]{0}', space=vmem, size = 0x20000, scoped, tag = 'input window, operand 0']
    #allocation4 [shape = 's32[2]{0}', space=sflag, size = 0x8, scoped, tag = 'scoped memory for tpu_custom_call.1']
    #allocation5 [shape = 's32[2]{0}', space=sflag, size = 0x8, scoped, tag = 'scoped memory for tpu_custom_call.1']
    #allocation6 [shape = 'u8[65536]{0}', space=vmem, size = 0x10000, scoped, tag = 'output window, operand 0']
    #allocation7 [shape = 'u8[65536]{0}', space=vmem, size = 0x10000, scoped, tag = 'output window, operand 1']
    #allocation8 [shape = 's32[2]{0}', space=sflag, size = 0x8, scoped, tag = 'scoped memory for tpu_custom_call.1']
    %12 = vsyncpa [#allocation4], 0
    %s13 = scalar_lea.sflag [#allocation4], 1
    %14 = vsyncpa %s13, 0
    %15 = vsyncpa [#allocation5], 0
    %s16 = scalar_lea.sflag [#allocation5], 1
    %17 = vsyncpa %s16, 0
    %18 = vsyncpa [#allocation8], 0
    %s19 = scalar_lea.sflag [#allocation8], 1
    %20 = vsyncpa %s19, 0
    loop: start=0, step=1, limit=4
    $region2: #{tpu_custom_call.1} parent=1 // loop_pre_header
      _
    $region3: #{tpu_custom_call.1} parent=1 // loop_header
      %s22 = sphi 0, %s26
      %p23 = scmp.ge.s32.totalorder %s22, 4
      %s32 = sphi 0, %s34
      %s35 = sphi 0, %s32
      %s36 = sphi 0, %s35
      %s52 = sphi 0, %s36
      %s56 = sphi 0, %s56
      %s58 = sphi 0, %s56
      %s59 = sphi 0, %s58
      %s73 = sphi 0, %s59
      %s77 = sphi 0, %s77
      %s79 = sphi 0, %s77
      %s80 = sphi 0, %s79
      %s94 = sphi 0, %s80
      %s98 = sphi 0, %s98
      %s100 = sphi 0, %s98
      %s101 = sphi 0, %s100
      %s115 = sphi 0, %s101
      %s119 = sphi 0, %s119
      %s121 = sphi 0, %s119
      %s122 = sphi 0, %s121
      %s136 = sphi 0, %s122
      %s142 = sphi 0, %s144
      %s145 = sphi 0, %s142
      %s146 = sphi 0, %s145
      %s162 = sphi 0, %s146
      %s168 = sphi 0, %s170
      %s171 = sphi 0, %s168
      %s172 = sphi 0, %s171
      %s188 = sphi 0, %s172
    $region4: #{tpu_custom_call.1} parent=1 // loop_header_branch
      %25 = sbr.rel (%p23) target = $region8
    $region5: #{tpu_custom_call.1} parent=1 // loop_body
      %s27 = ssub.s32 %s22, 1
      %s28 = ssub.s32 %s22, 2
      %s29 = sadd.s32 %s22, 1
      %s30 = ssub.s32 %s22, %s29
      %p31 = scmp.eq.s32.totalorder %s30, 0
      %s33 = sadd.s32 %s32, 1
      %s34 = scalar_select %p31, %s32, %s33
      %p37 = pneg %p31
      %p38 = scmp.eq.s32.totalorder %s22, 1
      %p39 = por %p37, %p38
      %p40 = scmp.ne.s32.totalorder %s32, %s35
      %p41 = scmp.eq.s32.totalorder %s22, 0
      %p42 = por %p40, %p41
      %p43 = scmp.ne.s32.totalorder %s32, %s35
      %p44 = scmp.eq.s32.totalorder %s27, 1
      %p45 = por %p43, %p44
      %p46 = scmp.ne.s32.totalorder %s35, %s36
      %p47 = scmp.eq.s32.totalorder %s27, 0
      %p48 = por %p46, %p47
      %p49 = scmp.ne.s32.totalorder %s35, %s36
      %p50 = scmp.eq.s32.totalorder %s28, 1
      %p51 = por %p49, %p50
      %p53 = scmp.ne.s32.totalorder %s36, %s52
      %p54 = scmp.eq.s32.totalorder %s28, 0
      %p55 = por %p53, %p54
      %s57 = sadd.s32 %s56, 1
      %p60 = scmp.eq.s32.totalorder %s22, 1
      %p61 = scmp.ne.s32.totalorder %s56, %s58
      %p62 = scmp.eq.s32.totalorder %s22, 0
      %p63 = por %p61, %p62
      %p64 = scmp.ne.s32.totalorder %s56, %s58
      %p65 = scmp.eq.s32.totalorder %s27, 1
      %p66 = por %p64, %p65
      %p67 = scmp.ne.s32.totalorder %s58, %s59
      %p68 = scmp.eq.s32.totalorder %s27, 0
      %p69 = por %p67, %p68
      %p70 = scmp.ne.s32.totalorder %s58, %s59
      %p71 = scmp.eq.s32.totalorder %s28, 1
      %p72 = por %p70, %p71
      %p74 = scmp.ne.s32.totalorder %s59, %s73
      %p75 = scmp.eq.s32.totalorder %s28, 0
      %p76 = por %p74, %p75
      %s78 = sadd.s32 %s77, 1
      %p81 = scmp.eq.s32.totalorder %s22, 1
      %p82 = scmp.ne.s32.totalorder %s77, %s79
      %p83 = scmp.eq.s32.totalorder %s22, 0
      %p84 = por %p82, %p83
      %p85 = scmp.ne.s32.totalorder %s77, %s79
      %p86 = scmp.eq.s32.totalorder %s27, 1
      %p87 = por %p85, %p86
      %p88 = scmp.ne.s32.totalorder %s79, %s80
      %p89 = scmp.eq.s32.totalorder %s27, 0
      %p90 = por %p88, %p89
      %p91 = scmp.ne.s32.totalorder %s79, %s80
      %p92 = scmp.eq.s32.totalorder %s28, 1
      %p93 = por %p91, %p92
      %p95 = scmp.ne.s32.totalorder %s80, %s94
      %p96 = scmp.eq.s32.totalorder %s28, 0
      %p97 = por %p95, %p96
      %s99 = sadd.s32 %s98, 1
      %p102 = scmp.eq.s32.totalorder %s22, 1
      %p103 = scmp.ne.s32.totalorder %s98, %s100
      %p104 = scmp.eq.s32.totalorder %s22, 0
      %p105 = por %p103, %p104
      %p106 = scmp.ne.s32.totalorder %s98, %s100
      %p107 = scmp.eq.s32.totalorder %s27, 1
      %p108 = por %p106, %p107
      %p109 = scmp.ne.s32.totalorder %s100, %s101
      %p110 = scmp.eq.s32.totalorder %s27, 0
      %p111 = por %p109, %p110
      %p112 = scmp.ne.s32.totalorder %s100, %s101
      %p113 = scmp.eq.s32.totalorder %s28, 1
      %p114 = por %p112, %p113
      %p116 = scmp.ne.s32.totalorder %s101, %s115
      %p117 = scmp.eq.s32.totalorder %s28, 0
      %p118 = por %p116, %p117
      %s120 = sadd.s32 %s119, 1
      %p123 = scmp.eq.s32.totalorder %s22, 1
      %p124 = scmp.ne.s32.totalorder %s119, %s121
      %p125 = scmp.eq.s32.totalorder %s22, 0
      %p126 = por %p124, %p125
      %p127 = scmp.ne.s32.totalorder %s119, %s121
      %p128 = scmp.eq.s32.totalorder %s27, 1
      %p129 = por %p127, %p128
      %p130 = scmp.ne.s32.totalorder %s121, %s122
      %p131 = scmp.eq.s32.totalorder %s27, 0
      %p132 = por %p130, %p131
      %p133 = scmp.ne.s32.totalorder %s121, %s122
      %p134 = scmp.eq.s32.totalorder %s28, 1
      %p135 = por %p133, %p134
      %p137 = scmp.ne.s32.totalorder %s122, %s136
      %p138 = scmp.eq.s32.totalorder %s28, 0
      %p139 = por %p137, %p138
      %s140 = ssub.s32 %s22, %s29
      %p141 = scmp.eq.s32.totalorder %s140, 0
      %s143 = sadd.s32 %s142, 1
      %s144 = scalar_select %p141, %s142, %s143
      %p147 = pneg %p141
      %p148 = scmp.eq.s32.totalorder %s22, 1
      %p149 = por %p147, %p148
      %p150 = scmp.ne.s32.totalorder %s142, %s145
      %p151 = scmp.eq.s32.totalorder %s22, 0
      %p152 = por %p150, %p151
      %p153 = scmp.ne.s32.totalorder %s142, %s145
      %p154 = scmp.eq.s32.totalorder %s27, 1
      %p155 = por %p153, %p154
      %p156 = scmp.ne.s32.totalorder %s145, %s146
      %p157 = scmp.eq.s32.totalorder %s27, 0
      %p158 = por %p156, %p157
      %p159 = scmp.ne.s32.totalorder %s145, %s146
      %p160 = scmp.eq.s32.totalorder %s28, 1
      %p161 = por %p159, %p160
      %p163 = scmp.ne.s32.totalorder %s146, %s162
      %p164 = scmp.eq.s32.totalorder %s28, 0
      %p165 = por %p163, %p164
      %s166 = ssub.s32 %s22, %s29
      %p167 = scmp.eq.s32.totalorder %s166, 0
      %s169 = sadd.s32 %s168, 1
      %s170 = scalar_select %p167, %s168, %s169
      %p173 = pneg %p167
      %p174 = scmp.eq.s32.totalorder %s22, 1
      %p175 = por %p173, %p174
      %p176 = scmp.ne.s32.totalorder %s168, %s171
      %p177 = scmp.eq.s32.totalorder %s22, 0
      %p178 = por %p176, %p177
      %p179 = scmp.ne.s32.totalorder %s168, %s171
      %p180 = scmp.eq.s32.totalorder %s27, 1
      %p181 = por %p179, %p180
      %p182 = scmp.ne.s32.totalorder %s171, %s172
      %p183 = scmp.eq.s32.totalorder %s27, 0
      %p184 = por %p182, %p183
      %p185 = scmp.ne.s32.totalorder %s171, %s172
      %p186 = scmp.eq.s32.totalorder %s28, 1
      %p187 = por %p185, %p186
      %p189 = scmp.ne.s32.totalorder %s172, %s188
      %p190 = scmp.eq.s32.totalorder %s28, 0
      %p191 = por %p189, %p190
      %p192 = scmp.le.s32.totalorder 1, %s22
      %p193 = scmp.lt.s32.totalorder %s22, 3
      %p194 = pnand %p192, %p193
      %p195 = pneg %p194
      // Predicated region
      $region9: #{tpu_custom_call.1} parent=5 // pred_check
        _
      $region10: #{tpu_custom_call.1} parent=5 // pred_check_branch
        %197 = sbr.rel (%p194) target = $region12
      $region11: #{tpu_custom_call.1} parent=5 // pred_region
        %s198 = ssub.s32 %s22, 1
        // Predicated region
        $region13: #{tpu_custom_call.1} parent=11 // pred_check
          %p199 = pneg %p69
        $region14: #{tpu_custom_call.1} parent=11 // pred_check_branch
          %201 = sbr.rel (%p199) target = $region16
        $region15: #{tpu_custom_call.1} parent=11 // pred_region
          _
        $region16: #{tpu_custom_call.1} parent=11 // pred_fallthru
          _
        // Predicated region
        $region17: #{tpu_custom_call.1} parent=11 // pred_check
          %p202 = pneg %p90
        $region18: #{tpu_custom_call.1} parent=11 // pred_check_branch
          %204 = sbr.rel (%p202) target = $region20
        $region19: #{tpu_custom_call.1} parent=11 // pred_region
          _
        $region20: #{tpu_custom_call.1} parent=11 // pred_fallthru
          _
        // Predicated region
        $region21: #{tpu_custom_call.1} parent=11 // pred_check
          %p205 = pneg %p111
        $region22: #{tpu_custom_call.1} parent=11 // pred_check_branch
          %207 = sbr.rel (%p205) target = $region24
        $region23: #{tpu_custom_call.1} parent=11 // pred_region
          _
        $region24: #{tpu_custom_call.1} parent=11 // pred_fallthru
          _
        // Predicated region
        $region25: #{tpu_custom_call.1} parent=11 // pred_check
          %p208 = pneg %p132
        $region26: #{tpu_custom_call.1} parent=11 // pred_check_branch
          %210 = sbr.rel (%p208) target = $region28
        $region27: #{tpu_custom_call.1} parent=11 // pred_region
          _
        $region28: #{tpu_custom_call.1} parent=11 // pred_fallthru
          _
      $region12: #{tpu_custom_call.1} parent=5 // pred_fallthru
        _
      %p211 = scmp.lt.s32.totalorder %s22, 2
      // Predicated region
      $region29: #{tpu_custom_call.1} parent=5 // pred_check
        %p212 = pneg %p211
      $region30: #{tpu_custom_call.1} parent=5 // pred_check_branch
        %214 = sbr.rel (%p212) target = $region32
      $region31: #{tpu_custom_call.1} parent=5 // pred_region
        // Predicated region
        $region33: #{tpu_custom_call.1} parent=31 // pred_check
          %p215 = pneg %p42
        $region34: #{tpu_custom_call.1} parent=31 // pred_check_branch
          %217 = sbr.rel (%p215) target = $region36
        $region35: #{tpu_custom_call.1} parent=31 // pred_region
          %s218 = sand.u32 %s32, 1
          %s219 = scalar_lea.sflag [#allocation4], %s218
          %s220 = sand.u32 %s32, 1
          %s221 = smul.addr %s220, 128
          %s222 = scalar_lea.vmem [#allocation3], %s221
          %s224 = ssub.s32 2048, 2048
          %225 = vsyncadd %s219, %s224
          %s226 = smul.addr %s22, 16
          %s227 = smul.addr %s226, 128
          %s228 = scalar_lea.hbm %s0, %s227
          %s229 = sshll.u32 %s222, 4
          %s230 = int_to_ptr.vmem [resolvable:$true] %s229
          %235 = dma.hbm_to_vmem [thread:$0]  %s228, 2048, %s230, %s219, 128, 128, 8
        $region36: #{tpu_custom_call.1} parent=31 // pred_fallthru
          _
      $region32: #{tpu_custom_call.1} parent=5 // pred_fallthru
        _
      %p236 = scmp.le.s32.totalorder 1, %s22
      %p237 = scmp.lt.s32.totalorder %s22, 3
      %p238 = pnand %p236, %p237
      %p239 = pneg %p238
      // Predicated region
      $region37: #{tpu_custom_call.1} parent=5 // pred_check
        _
      $region38: #{tpu_custom_call.1} parent=5 // pred_check_branch
        %241 = sbr.rel (%p238) target = $region40
      $region39: #{tpu_custom_call.1} parent=5 // pred_region
        %s242 = ssub.s32 %s22, 1
        %s243 = sand.u32 %s35, 1
        %s244 = scalar_lea.sflag [#allocation4], %s243
        %s245 = sand.u32 %s35, 1
        %s246 = smul.addr %s245, 128
        %s247 = scalar_lea.vmem [#allocation3], %s246
        // Predicated region
        $region41: #{tpu_custom_call.1} parent=39 // pred_check
          %p248 = pneg %p48
        $region42: #{tpu_custom_call.1} parent=39 // pred_check_branch
          %250 = sbr.rel (%p248) target = $region44
        $region43: #{tpu_custom_call.1} parent=39 // pred_region
          %251 = dma.done %s244, 2048
        $region44: #{tpu_custom_call.1} parent=39 // pred_fallthru
          _
        %s252 = sand.u32 %s35, 1
        %s253 = scalar_lea.sflag [#allocation4], %s252
        %s254 = sand.u32 %s35, 1
        %s255 = smul.addr %s254, 128
        %s256 = scalar_lea.vmem [#allocation3], %s255
        %p257 = pneg %p48
        %p258 = pneg %p45
        %p259 = pneg %p69
        %p260 = pneg %p66
        %p261 = pneg %p90
        %p262 = pneg %p87
        %p263 = pneg %p111
        %p264 = pneg %p108
        %p265 = pneg %p132
        %p266 = pneg %p129
        %p267 = pneg %p158
        %p268 = pneg %p155
        %s269 = sand.u32 %s145, 1
        %s270 = scalar_lea.sflag [#allocation5], %s269
        %s271 = sand.u32 %s145, 1
        %s272 = smul.addr %s271, 64
        %s273 = scalar_lea.vmem [#allocation6], %s272
        %p274 = pneg %p184
        %p275 = pneg %p181
        %s276 = sand.u32 %s171, 1
        %s277 = scalar_lea.sflag [#allocation8], %s276
        %s278 = sand.u32 %s171, 1
        %s279 = smul.addr %s278, 64
        %s280 = scalar_lea.vmem [#allocation7], %s279
        %vm282 = vcmask 60416
        %283 = vst.msk [vmem:[#allocation2] sm:$0xf] %vm282, 0
        %vm284 = vcmask 57344
        %vm285 = vsmask.f32 256
        %vm286 = vmand %vm284, %vm285
        %v287 = vld [vmem:[#allocation2 + $0x4] sm:$0x1]
        %v288 = vsel %vm286, 0, %v287
        %289 = vst [vmem:[#allocation2 + $0x4] sm:$0x1] %v288
        %290 = vst.msk [vmem:[#allocation2 + $0x8] sm:$0xf] %vm282, 0
        %v291 = vld [vmem:[#allocation2 + $0xc] sm:$0x1]
        %v292 = vsel %vm286, 0, %v291
        %293 = vst [vmem:[#allocation2 + $0xc] sm:$0x1] %v292
        %294 = vst.msk [vmem:[#allocation2 + $0x10] sm:$0xf] %vm282, 0
        %v295 = vld [vmem:[#allocation2 + $0x14] sm:$0x1]
        %v296 = vsel %vm286, 0, %v295
        %297 = vst [vmem:[#allocation2 + $0x14] sm:$0x1] %v296
        %298 = vst.msk [vmem:[#allocation2 + $0x18] sm:$0xf] %vm282, 0
        %v299 = vld [vmem:[#allocation2 + $0x1c] sm:$0x1]
        %v300 = vsel %vm286, 0, %v299
        %301 = vst [vmem:[#allocation2 + $0x1c] sm:$0x1] %v300
        %302 = vst.msk [vmem:[#allocation2 + $0x20] sm:$0xf] %vm282, 0
        %v303 = vld [vmem:[#allocation2 + $0x24] sm:$0x1]
        %v304 = vsel %vm286, 0, %v303
        %305 = vst [vmem:[#allocation2 + $0x24] sm:$0x1] %v304
        %306 = vst.msk [vmem:[#allocation2 + $0x28] sm:$0xf] %vm282, 0
        %v307 = vld [vmem:[#allocation2 + $0x2c] sm:$0x1]
        %v308 = vsel %vm286, 0, %v307
        %309 = vst [vmem:[#allocation2 + $0x2c] sm:$0x1] %v308
        %310 = vst.msk [vmem:[#allocation2 + $0x30] sm:$0xf] %vm282, 0
        %v311 = vld [vmem:[#allocation2 + $0x34] sm:$0x1]
        %v312 = vsel %vm286, 0, %v311
        %313 = vst [vmem:[#allocation2 + $0x34] sm:$0x1] %v312
        %314 = vst.msk [vmem:[#allocation2 + $0x38] sm:$0xf] %vm282, 0
        %v315 = vld [vmem:[#allocation2 + $0x3c] sm:$0x1]
        %v316 = vsel %vm286, 0, %v315
        %317 = vst [vmem:[#allocation2 + $0x3c] sm:$0x1] %v316
        %318 = vst.msk [vmem:[#allocation2 + $0x40] sm:$0xf] %vm282, 0
        %v319 = vld [vmem:[#allocation2 + $0x44] sm:$0x1]
        %v320 = vsel %vm286, 0, %v319
        %321 = vst [vmem:[#allocation2 + $0x44] sm:$0x1] %v320
        %322 = vst.msk [vmem:[#allocation2 + $0x48] sm:$0xf] %vm282, 0
        %v323 = vld [vmem:[#allocation2 + $0x4c] sm:$0x1]
        %v324 = vsel %vm286, 0, %v323
        %325 = vst [vmem:[#allocation2 + $0x4c] sm:$0x1] %v324
        %326 = vst.msk [vmem:[#allocation2 + $0x50] sm:$0xf] %vm282, 0
        %v327 = vld [vmem:[#allocation2 + $0x54] sm:$0x1]
        %v328 = vsel %vm286, 0, %v327
        %329 = vst [vmem:[#allocation2 + $0x54] sm:$0x1] %v328
        %330 = vst.msk [vmem:[#allocation2 + $0x58] sm:$0xf] %vm282, 0
        %v331 = vld [vmem:[#allocation2 + $0x5c] sm:$0x1]
        %v332 = vsel %vm286, 0, %v331
        %333 = vst [vmem:[#allocation2 + $0x5c] sm:$0x1] %v332
        %334 = vst.msk [vmem:[#allocation2 + $0x60] sm:$0xf] %vm282, 0
        %v335 = vld [vmem:[#allocation2 + $0x64] sm:$0x1]
        %v336 = vsel %vm286, 0, %v335
        %337 = vst [vmem:[#allocation2 + $0x64] sm:$0x1] %v336
        %338 = vst.msk [vmem:[#allocation2 + $0x68] sm:$0xf] %vm282, 0
        %v339 = vld [vmem:[#allocation2 + $0x6c] sm:$0x1]
        %v340 = vsel %vm286, 0, %v339
        %341 = vst [vmem:[#allocation2 + $0x6c] sm:$0x1] %v340
        %342 = vst.msk [vmem:[#allocation2 + $0x70] sm:$0xf] %vm282, 0
        %v343 = vld [vmem:[#allocation2 + $0x74] sm:$0x1]
        %v344 = vsel %vm286, 0, %v343
        %345 = vst [vmem:[#allocation2 + $0x74] sm:$0x1] %v344
        %346 = vst.msk [vmem:[#allocation2 + $0x78] sm:$0xf] %vm282, 0
        %v347 = vld [vmem:[#allocation2 + $0x7c] sm:$0x1]
        %v348 = vsel %vm286, 0, %v347
        %349 = vst [vmem:[#allocation2 + $0x7c] sm:$0x1] %v348
        %350 = vst.msk [vmem:[#allocation2 + $0x80] sm:$0xf] %vm282, 0
        %v351 = vld [vmem:[#allocation2 + $0x84] sm:$0x1]
        %v352 = vsel %vm286, 0, %v351
        %353 = vst [vmem:[#allocation2 + $0x84] sm:$0x1] %v352
        %354 = vst.msk [vmem:[#allocation2 + $0x88] sm:$0xf] %vm282, 0
        %v355 = vld [vmem:[#allocation2 + $0x8c] sm:$0x1]
        %v356 = vsel %vm286, 0, %v355
        %357 = vst [vmem:[#allocation2 + $0x8c] sm:$0x1] %v356
        %v358 = vld [vmem:[%s247] sm:$0xff]
        %v359 = vld [vmem:[%s247 + $0x8] sm:$0xff]
        %v360 = vld [vmem:[%s247 + $0x10] sm:$0xff]
        %v361 = vld [vmem:[%s247 + $0x18] sm:$0xff]
        %v362 = vld [vmem:[%s247 + $0x20] sm:$0xff]
        %v363 = vld [vmem:[%s247 + $0x28] sm:$0xff]
        %v364 = vld [vmem:[%s247 + $0x30] sm:$0xff]
        %v365 = vld [vmem:[%s247 + $0x38] sm:$0xff]
        %v366 = vld [vmem:[%s247 + $0x40] sm:$0xff]
        %v367 = vld [vmem:[%s247 + $0x48] sm:$0xff]
        %v368 = vld [vmem:[%s247 + $0x50] sm:$0xff]
        %v369 = vld [vmem:[%s247 + $0x58] sm:$0xff]
        %v370 = vld [vmem:[%s247 + $0x60] sm:$0xff]
        %v371 = vld [vmem:[%s247 + $0x68] sm:$0xff]
        %v372 = vld [vmem:[%s247 + $0x70] sm:$0xff]
        %v373 = vld [vmem:[%s247 + $0x78] sm:$0xff]
        %v374 = vld [vmem:[%s1] sm:$0x1]
        %v376 = vlaneseq
        %v377 = vshrl.u32 %v376, 7
        %v378 = vsub.s32 0, %v377
        %v379 = vrot.slane %v374, %v378
        %v381 = vmul.f32 %v358, %v379
        %v382 = vmul.f32 %v359, %v379
        %v383 = vmul.f32 %v360, %v379
        %v384 = vmul.f32 %v361, %v379
        %v385 = vmul.f32 %v362, %v379
        %v386 = vmul.f32 %v363, %v379
        %v387 = vmul.f32 %v364, %v379
        %v388 = vmul.f32 %v365, %v379
        %v389 = vmul.f32 %v366, %v379
        %v390 = vmul.f32 %v367, %v379
        %v391 = vmul.f32 %v368, %v379
        %v392 = vmul.f32 %v369, %v379
        %v393 = vmul.f32 %v370, %v379
        %v394 = vmul.f32 %v371, %v379
        %v395 = vmul.f32 %v372, %v379
        %v396 = vmul.f32 %v373, %v379
        %v397 = vld [vmem:[%s2] sm:$0x1]
        %v399 = vlaneseq
        %v400 = vshrl.u32 %v399, 7
        %v401 = vsub.s32 0, %v400
        %v402 = vrot.slane %v397, %v401
        %v404 = vadd.f32 %v381, %v402
        %v405 = vadd.f32 %v382, %v402
        %v406 = vadd.f32 %v383, %v402
        %v407 = vadd.f32 %v384, %v402
        %v408 = vadd.f32 %v385, %v402
        %v409 = vadd.f32 %v386, %v402
        %v410 = vadd.f32 %v387, %v402
        %v411 = vadd.f32 %v388, %v402
        %v412 = vadd.f32 %v389, %v402
        %v413 = vadd.f32 %v390, %v402
        %v414 = vadd.f32 %v391, %v402
        %v415 = vadd.f32 %v392, %v402
        %v416 = vadd.f32 %v393, %v402
        %v417 = vadd.f32 %v394, %v402
        %v418 = vadd.f32 %v395, %v402
        %v419 = vadd.f32 %v396, %v402
        %v420 = vmax.f32 %v404, 0.0
        %v421 = vmax.f32 %v405, 0.0
        %v422 = vmax.f32 %v406, 0.0
        %v423 = vmax.f32 %v407, 0.0
        %v424 = vmax.f32 %v408, 0.0
        %v425 = vmax.f32 %v409, 0.0
        %v426 = vmax.f32 %v410, 0.0
        %v427 = vmax.f32 %v411, 0.0
        %v428 = vmax.f32 %v412, 0.0
        %v429 = vmax.f32 %v413, 0.0
        %v430 = vmax.f32 %v414, 0.0
        %v431 = vmax.f32 %v415, 0.0
        %v432 = vmax.f32 %v416, 0.0
        %v433 = vmax.f32 %v417, 0.0
        %v434 = vmax.f32 %v418, 0.0
        %v435 = vmax.f32 %v419, 0.0
        %v436 = vpack.c.bf16 %v420, %v420
        %v437 = vpack.c.bf16 %v421, %v421
        %v438 = vpack.c.bf16 %v422, %v422
        %v439 = vpack.c.bf16 %v423, %v423
        %v440 = vpack.c.bf16 %v424, %v424
        %v441 = vpack.c.bf16 %v425, %v425
        %v442 = vpack.c.bf16 %v426, %v426
        %v443 = vpack.c.bf16 %v427, %v427
        %v444 = vpack.c.bf16 %v428, %v428
        %v445 = vpack.c.bf16 %v429, %v429
        %v446 = vpack.c.bf16 %v430, %v430
        %v447 = vpack.c.bf16 %v431, %v431
        %v448 = vpack.c.bf16 %v432, %v432
        %v449 = vpack.c.bf16 %v433, %v433
        %v450 = vpack.c.bf16 %v434, %v434
        %v451 = vpack.c.bf16 %v435, %v435
        %v468 = vunpack.c.l.b16 %v436
        %v469 = vunpack.c.l.b16 %v437
        %v470 = vunpack.c.l.b16 %v438
        %v471 = vunpack.c.l.b16 %v439
        %v472 = vunpack.c.l.b16 %v440
        %v473 = vunpack.c.l.b16 %v441
        %v474 = vunpack.c.l.b16 %v442
        %v475 = vunpack.c.l.b16 %v443
        %v476 = vunpack.c.l.b16 %v444
        %v477 = vunpack.c.l.b16 %v445
        %v478 = vunpack.c.l.b16 %v446
        %v479 = vunpack.c.l.b16 %v447
        %v480 = vunpack.c.l.b16 %v448
        %v481 = vunpack.c.l.b16 %v449
        %v482 = vunpack.c.l.b16 %v450
        %v483 = vunpack.c.l.b16 %v451
        %v484 = vpack.c.b16 %v468, %v468
        %v485 = vpack.c.b16 %v469, %v469
        %v486 = vpack.c.b16 %v470, %v470
        %v487 = vpack.c.b16 %v471, %v471
        %v488 = vpack.c.b16 %v472, %v472
        %v489 = vpack.c.b16 %v473, %v473
        %v490 = vpack.c.b16 %v474, %v474
        %v491 = vpack.c.b16 %v475, %v475
        %v492 = vpack.c.b16 %v476, %v476
        %v493 = vpack.c.b16 %v477, %v477
        %v494 = vpack.c.b16 %v478, %v478
        %v495 = vpack.c.b16 %v479, %v479
        %v496 = vpack.c.b16 %v480, %v480
        %v497 = vpack.c.b16 %v481, %v481
        %v498 = vpack.c.b16 %v482, %v482
        %v499 = vpack.c.b16 %v483, %v483
        %v501 = vshrl.u32 %v484, 16
        %v503 = vrot.slane %v501, 7
        %v504 = vshll.u32 %v484, 16
        %v506 = vor.u32 %v503, %v504
        %v507 = vrot.slane %v503, 4
        %v509 = vshrl.u32 %v485, 16
        %v511 = vrot.slane %v509, 7
        %v512 = vshll.u32 %v485, 16
        %v514 = vor.u32 %v511, %v512
        %v515 = vrot.slane %v511, 4
        %v517 = vshrl.u32 %v486, 16
        %v519 = vrot.slane %v517, 7
        %v520 = vshll.u32 %v486, 16
        %v522 = vor.u32 %v519, %v520
        %v523 = vrot.slane %v519, 4
        %v525 = vshrl.u32 %v487, 16
        %v527 = vrot.slane %v525, 7
        %v528 = vshll.u32 %v487, 16
        %v530 = vor.u32 %v527, %v528
        %v531 = vrot.slane %v527, 4
        %v533 = vshrl.u32 %v488, 16
        %v535 = vrot.slane %v533, 7
        %v536 = vshll.u32 %v488, 16
        %v538 = vor.u32 %v535, %v536
        %v539 = vrot.slane %v535, 4
        %v541 = vshrl.u32 %v489, 16
        %v543 = vrot.slane %v541, 7
        %v544 = vshll.u32 %v489, 16
        %v546 = vor.u32 %v543, %v544
        %v547 = vrot.slane %v543, 4
        %v549 = vshrl.u32 %v490, 16
        %v551 = vrot.slane %v549, 7
        %v552 = vshll.u32 %v490, 16
        %v554 = vor.u32 %v551, %v552
        %v555 = vrot.slane %v551, 4
        %v557 = vshrl.u32 %v491, 16
        %v559 = vrot.slane %v557, 7
        %v560 = vshll.u32 %v491, 16
        %v562 = vor.u32 %v559, %v560
        %v563 = vrot.slane %v559, 4
        %v565 = vshrl.u32 %v492, 16
        %v567 = vrot.slane %v565, 7
        %v568 = vshll.u32 %v492, 16
        %v570 = vor.u32 %v567, %v568
        %v571 = vrot.slane %v567, 4
        %v573 = vshrl.u32 %v493, 16
        %v575 = vrot.slane %v573, 7
        %v576 = vshll.u32 %v493, 16
        %v578 = vor.u32 %v575, %v576
        %v579 = vrot.slane %v575, 4
        %v581 = vshrl.u32 %v494, 16
        %v583 = vrot.slane %v581, 7
        %v584 = vshll.u32 %v494, 16
        %v586 = vor.u32 %v583, %v584
        %v587 = vrot.slane %v583, 4
        %v589 = vshrl.u32 %v495, 16
        %v591 = vrot.slane %v589, 7
        %v592 = vshll.u32 %v495, 16
        %v594 = vor.u32 %v591, %v592
        %v595 = vrot.slane %v591, 4
        %v597 = vshrl.u32 %v496, 16
        %v599 = vrot.slane %v597, 7
        %v600 = vshll.u32 %v496, 16
        %v602 = vor.u32 %v599, %v600
        %v603 = vrot.slane %v599, 4
        %v605 = vshrl.u32 %v497, 16
        %v607 = vrot.slane %v605, 7
        %v608 = vshll.u32 %v497, 16
        %v610 = vor.u32 %v607, %v608
        %v611 = vrot.slane %v607, 4
        %v613 = vshrl.u32 %v498, 16
        %v615 = vrot.slane %v613, 7
        %v616 = vshll.u32 %v498, 16
        %v618 = vor.u32 %v615, %v616
        %v619 = vrot.slane %v615, 4
        %v621 = vshrl.u32 %v499, 16
        %v623 = vrot.slane %v621, 7
        %v624 = vshll.u32 %v499, 16
        %v626 = vor.u32 %v623, %v624
        %v627 = vrot.slane %v623, 4
        %s660 = scalar_lea.vmem [#allocation2], 16
        %vm661 = vcmask 60416
        %vm662 = vsmask.f32 7938
        %vm663 = vmand %vm661, %vm662
        %v664 = vld [vmem:[%s660] sm:$0xf]
        %v665 = vsel %vm663, %v506, %v664
        %666 = vst [vmem:[%s660] sm:$0xf] %v665
        %v667 = vld [vmem:[%s660 + $0x4] sm:$0x1]
        %v668 = vsel %vm286, %v507, %v667
        %669 = vst [vmem:[%s660 + $0x4] sm:$0x1] %v668
        %v670 = vld [vmem:[%s660 + $0x8] sm:$0xf]
        %v671 = vsel %vm663, %v514, %v670
        %672 = vst [vmem:[%s660 + $0x8] sm:$0xf] %v671
        %v673 = vld [vmem:[%s660 + $0xc] sm:$0x1]
        %v674 = vsel %vm286, %v515, %v673
        %675 = vst [vmem:[%s660 + $0xc] sm:$0x1] %v674
        %v676 = vld [vmem:[%s660 + $0x10] sm:$0xf]
        %v677 = vsel %vm663, %v522, %v676
        %678 = vst [vmem:[%s660 + $0x10] sm:$0xf] %v677
        %v679 = vld [vmem:[%s660 + $0x14] sm:$0x1]
        %v680 = vsel %vm286, %v523, %v679
        %681 = vst [vmem:[%s660 + $0x14] sm:$0x1] %v680
        %v682 = vld [vmem:[%s660 + $0x18] sm:$0xf]
        %v683 = vsel %vm663, %v530, %v682
        %684 = vst [vmem:[%s660 + $0x18] sm:$0xf] %v683
        %v685 = vld [vmem:[%s660 + $0x1c] sm:$0x1]
        %v686 = vsel %vm286, %v531, %v685
        %687 = vst [vmem:[%s660 + $0x1c] sm:$0x1] %v686
        %v688 = vld [vmem:[%s660 + $0x20] sm:$0xf]
        %v689 = vsel %vm663, %v538, %v688
        %690 = vst [vmem:[%s660 + $0x20] sm:$0xf] %v689
        %v691 = vld [vmem:[%s660 + $0x24] sm:$0x1]
        %v692 = vsel %vm286, %v539, %v691
        %693 = vst [vmem:[%s660 + $0x24] sm:$0x1] %v692
        %v694 = vld [vmem:[%s660 + $0x28] sm:$0xf]
        %v695 = vsel %vm663, %v546, %v694
        %696 = vst [vmem:[%s660 + $0x28] sm:$0xf] %v695
        %v697 = vld [vmem:[%s660 + $0x2c] sm:$0x1]
        %v698 = vsel %vm286, %v547, %v697
        %699 = vst [vmem:[%s660 + $0x2c] sm:$0x1] %v698
        %v700 = vld [vmem:[%s660 + $0x30] sm:$0xf]
        %v701 = vsel %vm663, %v554, %v700
        %702 = vst [vmem:[%s660 + $0x30] sm:$0xf] %v701
        %v703 = vld [vmem:[%s660 + $0x34] sm:$0x1]
        %v704 = vsel %vm286, %v555, %v703
        %705 = vst [vmem:[%s660 + $0x34] sm:$0x1] %v704
        %v706 = vld [vmem:[%s660 + $0x38] sm:$0xf]
        %v707 = vsel %vm663, %v562, %v706
        %708 = vst [vmem:[%s660 + $0x38] sm:$0xf] %v707
        %v709 = vld [vmem:[%s660 + $0x3c] sm:$0x1]
        %v710 = vsel %vm286, %v563, %v709
        %711 = vst [vmem:[%s660 + $0x3c] sm:$0x1] %v710
        %v712 = vld [vmem:[%s660 + $0x40] sm:$0xf]
        %v713 = vsel %vm663, %v570, %v712
        %714 = vst [vmem:[%s660 + $0x40] sm:$0xf] %v713
        %v715 = vld [vmem:[%s660 + $0x44] sm:$0x1]
        %v716 = vsel %vm286, %v571, %v715
        %717 = vst [vmem:[%s660 + $0x44] sm:$0x1] %v716
        %v718 = vld [vmem:[%s660 + $0x48] sm:$0xf]
        %v719 = vsel %vm663, %v578, %v718
        %720 = vst [vmem:[%s660 + $0x48] sm:$0xf] %v719
        %v721 = vld [vmem:[%s660 + $0x4c] sm:$0x1]
        %v722 = vsel %vm286, %v579, %v721
        %723 = vst [vmem:[%s660 + $0x4c] sm:$0x1] %v722
        %v724 = vld [vmem:[%s660 + $0x50] sm:$0xf]
        %v725 = vsel %vm663, %v586, %v724
        %726 = vst [vmem:[%s660 + $0x50] sm:$0xf] %v725
        %v727 = vld [vmem:[%s660 + $0x54] sm:$0x1]
        %v728 = vsel %vm286, %v587, %v727
        %729 = vst [vmem:[%s660 + $0x54] sm:$0x1] %v728
        %v730 = vld [vmem:[%s660 + $0x58] sm:$0xf]
        %v731 = vsel %vm663, %v594, %v730
        %732 = vst [vmem:[%s660 + $0x58] sm:$0xf] %v731
        %v733 = vld [vmem:[%s660 + $0x5c] sm:$0x1]
        %v734 = vsel %vm286, %v595, %v733
        %735 = vst [vmem:[%s660 + $0x5c] sm:$0x1] %v734
        %v736 = vld [vmem:[%s660 + $0x60] sm:$0xf]
        %v737 = vsel %vm663, %v602, %v736
        %738 = vst [vmem:[%s660 + $0x60] sm:$0xf] %v737
        %v739 = vld [vmem:[%s660 + $0x64] sm:$0x1]
        %v740 = vsel %vm286, %v603, %v739
        %741 = vst [vmem:[%s660 + $0x64] sm:$0x1] %v740
        %v742 = vld [vmem:[%s660 + $0x68] sm:$0xf]
        %v743 = vsel %vm663, %v610, %v742
        %744 = vst [vmem:[%s660 + $0x68] sm:$0xf] %v743
        %v745 = vld [vmem:[%s660 + $0x6c] sm:$0x1]
        %v746 = vsel %vm286, %v611, %v745
        %747 = vst [vmem:[%s660 + $0x6c] sm:$0x1] %v746
        %v748 = vld [vmem:[%s660 + $0x70] sm:$0xf]
        %v749 = vsel %vm663, %v618, %v748
        %750 = vst [vmem:[%s660 + $0x70] sm:$0xf] %v749
        %v751 = vld [vmem:[%s660 + $0x74] sm:$0x1]
        %v752 = vsel %vm286, %v619, %v751
        %753 = vst [vmem:[%s660 + $0x74] sm:$0x1] %v752
        %v754 = vld [vmem:[%s660 + $0x78] sm:$0xf]
        %v755 = vsel %vm663, %v626, %v754
        %756 = vst [vmem:[%s660 + $0x78] sm:$0xf] %v755
        %v757 = vld [vmem:[%s660 + $0x7c] sm:$0x1]
        %v758 = vsel %vm286, %v627, %v757
        %759 = vst [vmem:[%s660 + $0x7c] sm:$0x1] %v758
        %s760 = scalar_lea.vmem [#allocation2], 8
        %v761 = vld [vmem:[%s760] sm:$0xf]
        %v762 = vld [vmem:[%s760 + $0x10] sm:$0xf]
        %v763 = vld [vmem:[%s760 + $0x20] sm:$0xf]
        %v764 = vld [vmem:[%s760 + $0x30] sm:$0xf]
        %v765 = vld [vmem:[%s760 + $0x40] sm:$0xf]
        %v766 = vld [vmem:[%s760 + $0x50] sm:$0xf]
        %v767 = vld [vmem:[%s760 + $0x60] sm:$0xf]
        %v768 = vld [vmem:[%s760 + $0x70] sm:$0xf]
        %v769 = vld [vmem:[%s760 + $0x4] sm:$0x1]
        %v770 = vld [vmem:[%s760 + $0x14] sm:$0x1]
        %v771 = vld [vmem:[%s760 + $0x24] sm:$0x1]
        %v772 = vld [vmem:[%s760 + $0x34] sm:$0x1]
        %v773 = vld [vmem:[%s760 + $0x44] sm:$0x1]
        %v774 = vld [vmem:[%s760 + $0x54] sm:$0x1]
        %v775 = vld [vmem:[%s760 + $0x64] sm:$0x1]
        %v776 = vld [vmem:[%s760 + $0x74] sm:$0x1]
        %v777 = vld [vmem:[%s660] sm:$0xf]
        %v778 = vld [vmem:[%s660 + $0x10] sm:$0xf]
        %v779 = vld [vmem:[%s660 + $0x20] sm:$0xf]
        %v780 = vld [vmem:[%s660 + $0x30] sm:$0xf]
        %v781 = vld [vmem:[%s660 + $0x40] sm:$0xf]
        %v782 = vld [vmem:[%s660 + $0x50] sm:$0xf]
        %v783 = vld [vmem:[%s660 + $0x60] sm:$0xf]
        %v784 = vld [vmem:[%s660 + $0x70] sm:$0xf]
        %v785 = vld [vmem:[%s660 + $0x4] sm:$0x1]
        %v786 = vld [vmem:[%s660 + $0x14] sm:$0x1]
        %v787 = vld [vmem:[%s660 + $0x24] sm:$0x1]
        %v788 = vld [vmem:[%s660 + $0x34] sm:$0x1]
        %v789 = vld [vmem:[%s660 + $0x44] sm:$0x1]
        %v790 = vld [vmem:[%s660 + $0x54] sm:$0x1]
        %v791 = vld [vmem:[%s660 + $0x64] sm:$0x1]
        %v792 = vld [vmem:[%s660 + $0x74] sm:$0x1]
        %s793 = scalar_lea.vmem [#allocation2], 24
        %v794 = vld [vmem:[%s793] sm:$0xf]
        %v795 = vld [vmem:[%s793 + $0x10] sm:$0xf]
        %v796 = vld [vmem:[%s793 + $0x20] sm:$0xf]
        %v797 = vld [vmem:[%s793 + $0x30] sm:$0xf]
        %v798 = vld [vmem:[%s793 + $0x40] sm:$0xf]
        %v799 = vld [vmem:[%s793 + $0x50] sm:$0xf]
        %v800 = vld [vmem:[%s793 + $0x60] sm:$0xf]
        %v801 = vld [vmem:[%s793 + $0x70] sm:$0xf]
        %v802 = vld [vmem:[%s793 + $0x4] sm:$0x1]
        %v803 = vld [vmem:[%s793 + $0x14] sm:$0x1]
        %v804 = vld [vmem:[%s793 + $0x24] sm:$0x1]
        %v805 = vld [vmem:[%s793 + $0x34] sm:$0x1]
        %v806 = vld [vmem:[%s793 + $0x44] sm:$0x1]
        %v807 = vld [vmem:[%s793 + $0x54] sm:$0x1]
        %v808 = vld [vmem:[%s793 + $0x64] sm:$0x1]
        %v809 = vld [vmem:[%s793 + $0x74] sm:$0x1]
        %v826 = vunpack.c.l.b16 %v761
        %v827 = vunpack.c.l.b16 %v769
        %v828 = vunpack.c.l.b16 %v762
        %v829 = vunpack.c.l.b16 %v770
        %v830 = vunpack.c.l.b16 %v763
        %v831 = vunpack.c.l.b16 %v771
        %v832 = vunpack.c.l.b16 %v764
        %v833 = vunpack.c.l.b16 %v772
        %v834 = vunpack.c.l.b16 %v765
        %v835 = vunpack.c.l.b16 %v773
        %v836 = vunpack.c.l.b16 %v766
        %v837 = vunpack.c.l.b16 %v774
        %v838 = vunpack.c.l.b16 %v767
        %v839 = vunpack.c.l.b16 %v775
        %v840 = vunpack.c.l.b16 %v768
        %v841 = vunpack.c.l.b16 %v776
        %v842 = vpack.c.b16 %v827, %v826
        %v843 = vpack.c.b16 %v829, %v828
        %v844 = vpack.c.b16 %v831, %v830
        %v845 = vpack.c.b16 %v833, %v832
        %v846 = vpack.c.b16 %v835, %v834
        %v847 = vpack.c.b16 %v837, %v836
        %v848 = vpack.c.b16 %v839, %v838
        %v849 = vpack.c.b16 %v841, %v840
        %v851 = vshrl.u32 %v842, 16
        %v853 = vshll.u32 %v842, 16
        %v855 = vrot.slane %v853, 1
        %v856 = vor.u32 %v851, %v855
        %v858 = vshrl.u32 %v843, 16
        %v860 = vshll.u32 %v843, 16
        %v862 = vrot.slane %v860, 1
        %v863 = vor.u32 %v858, %v862
        %v865 = vshrl.u32 %v844, 16
        %v867 = vshll.u32 %v844, 16
        %v869 = vrot.slane %v867, 1
        %v870 = vor.u32 %v865, %v869
        %v872 = vshrl.u32 %v845, 16
        %v874 = vshll.u32 %v845, 16
        %v876 = vrot.slane %v874, 1
        %v877 = vor.u32 %v872, %v876
        %v879 = vshrl.u32 %v846, 16
        %v881 = vshll.u32 %v846, 16
        %v883 = vrot.slane %v881, 1
        %v884 = vor.u32 %v879, %v883
        %v886 = vshrl.u32 %v847, 16
        %v888 = vshll.u32 %v847, 16
        %v890 = vrot.slane %v888, 1
        %v891 = vor.u32 %v886, %v890
        %v893 = vshrl.u32 %v848, 16
        %v895 = vshll.u32 %v848, 16
        %v897 = vrot.slane %v895, 1
        %v898 = vor.u32 %v893, %v897
        %v900 = vshrl.u32 %v849, 16
        %v902 = vshll.u32 %v849, 16
        %v904 = vrot.slane %v902, 1
        %v905 = vor.u32 %v900, %v904
        %906 = vrot.lane.b32.xlu0 %v856, 8
        %v907 = vpop.permute.xlu0 %906
        %908 = vrot.lane.b32.xlu0 %v863, 8
        %v909 = vpop.permute.xlu0 %908
        %910 = vrot.lane.b32.xlu0 %v870, 8
        %v911 = vpop.permute.xlu0 %910
        %912 = vrot.lane.b32.xlu0 %v877, 8
        %v913 = vpop.permute.xlu0 %912
        %914 = vrot.lane.b32.xlu0 %v884, 8
        %v915 = vpop.permute.xlu0 %914
        %916 = vrot.lane.b32.xlu0 %v891, 8
        %v917 = vpop.permute.xlu0 %916
        %918 = vrot.lane.b32.xlu0 %v898, 8
        %v919 = vpop.permute.xlu0 %918
        %920 = vrot.lane.b32.xlu0 %v905, 8
        %v921 = vpop.permute.xlu0 %920
        %v930 = vunpack.c.l.b16 %v777
        %v931 = vunpack.c.l.b16 %v778
        %v932 = vunpack.c.l.b16 %v779
        %v933 = vunpack.c.l.b16 %v780
        %v934 = vunpack.c.l.b16 %v781
        %v935 = vunpack.c.l.b16 %v782
        %v936 = vunpack.c.l.b16 %v783
        %v937 = vunpack.c.l.b16 %v784
        %v938 = vpack.c.b16 %v930, %v930
        %v939 = vpack.c.b16 %v931, %v931
        %v940 = vpack.c.b16 %v932, %v932
        %v941 = vpack.c.b16 %v933, %v933
        %v942 = vpack.c.b16 %v934, %v934
        %v943 = vpack.c.b16 %v935, %v935
        %v944 = vpack.c.b16 %v936, %v936
        %v945 = vpack.c.b16 %v937, %v937
        %946 = vrot.lane.b32.xlu0 %v938, 16
        %v947 = vpop.permute.xlu0 %946
        %948 = vrot.lane.b32.xlu0 %v939, 16
        %v949 = vpop.permute.xlu0 %948
        %950 = vrot.lane.b32.xlu0 %v940, 16
        %v951 = vpop.permute.xlu0 %950
        %952 = vrot.lane.b32.xlu0 %v941, 16
        %v953 = vpop.permute.xlu0 %952
        %954 = vrot.lane.b32.xlu0 %v942, 16
        %v955 = vpop.permute.xlu0 %954
        %956 = vrot.lane.b32.xlu0 %v943, 16
        %v957 = vpop.permute.xlu0 %956
        %958 = vrot.lane.b32.xlu0 %v944, 16
        %v959 = vpop.permute.xlu0 %958
        %960 = vrot.lane.b32.xlu0 %v945, 16
        %v961 = vpop.permute.xlu0 %960
        %v970 = vunpack.c.l.b16 %v785
        %v971 = vunpack.c.l.b16 %v786
        %v972 = vunpack.c.l.b16 %v787
        %v973 = vunpack.c.l.b16 %v788
        %v974 = vunpack.c.l.b16 %v789
        %v975 = vunpack.c.l.b16 %v790
        %v976 = vunpack.c.l.b16 %v791
        %v977 = vunpack.c.l.b16 %v792
        %v978 = vpack.c.b16 %v970, %v930
        %v979 = vpack.c.b16 %v971, %v931
        %v980 = vpack.c.b16 %v972, %v932
        %v981 = vpack.c.b16 %v973, %v933
        %v982 = vpack.c.b16 %v974, %v934
        %v983 = vpack.c.b16 %v975, %v935
        %v984 = vpack.c.b16 %v976, %v936
        %v985 = vpack.c.b16 %v977, %v937
        %v987 = vshrl.u32 %v978, 16
        %v989 = vshll.u32 %v978, 16
        %v991 = vrot.slane %v989, 1
        %v992 = vor.u32 %v987, %v991
        %v994 = vshrl.u32 %v979, 16
        %v996 = vshll.u32 %v979, 16
        %v998 = vrot.slane %v996, 1
        %v999 = vor.u32 %v994, %v998
        %v1001 = vshrl.u32 %v980, 16
        %v1003 = vshll.u32 %v980, 16
        %v1005 = vrot.slane %v1003, 1
        %v1006 = vor.u32 %v1001, %v1005
        %v1008 = vshrl.u32 %v981, 16
        %v1010 = vshll.u32 %v981, 16
        %v1012 = vrot.slane %v1010, 1
        %v1013 = vor.u32 %v1008, %v1012
        %v1015 = vshrl.u32 %v982, 16
        %v1017 = vshll.u32 %v982, 16
        %v1019 = vrot.slane %v1017, 1
        %v1020 = vor.u32 %v1015, %v1019
        %v1022 = vshrl.u32 %v983, 16
        %v1024 = vshll.u32 %v983, 16
        %v1026 = vrot.slane %v1024, 1
        %v1027 = vor.u32 %v1022, %v1026
        %v1029 = vshrl.u32 %v984, 16
        %v1031 = vshll.u32 %v984, 16
        %v1033 = vrot.slane %v1031, 1
        %v1034 = vor.u32 %v1029, %v1033
        %v1036 = vshrl.u32 %v985, 16
        %v1038 = vshll.u32 %v985, 16
        %v1040 = vrot.slane %v1038, 1
        %v1041 = vor.u32 %v1036, %v1040
        %1042 = vrot.lane.b32.xlu0 %v992, 24
        %v1043 = vpop.permute.xlu0 %1042
        %1044 = vrot.lane.b32.xlu0 %v999, 24
        %v1045 = vpop.permute.xlu0 %1044
        %1046 = vrot.lane.b32.xlu0 %v1006, 24
        %v1047 = vpop.permute.xlu0 %1046
        %1048 = vrot.lane.b32.xlu0 %v1013, 24
        %v1049 = vpop.permute.xlu0 %1048
        %1050 = vrot.lane.b32.xlu0 %v1020, 24
        %v1051 = vpop.permute.xlu0 %1050
        %1052 = vrot.lane.b32.xlu0 %v1027, 24
        %v1053 = vpop.permute.xlu0 %1052
        %1054 = vrot.lane.b32.xlu0 %v1034, 24
        %v1055 = vpop.permute.xlu0 %1054
        %1056 = vrot.lane.b32.xlu0 %v1041, 24
        %v1057 = vpop.permute.xlu0 %1056
        %v1066 = vunpack.c.l.b16 %v794
        %v1067 = vunpack.c.l.b16 %v795
        %v1068 = vunpack.c.l.b16 %v796
        %v1069 = vunpack.c.l.b16 %v797
        %v1070 = vunpack.c.l.b16 %v798
        %v1071 = vunpack.c.l.b16 %v799
        %v1072 = vunpack.c.l.b16 %v800
        %v1073 = vunpack.c.l.b16 %v801
        %v1074 = vpack.c.b16 %v1066, %v1066
        %v1075 = vpack.c.b16 %v1067, %v1067
        %v1076 = vpack.c.b16 %v1068, %v1068
        %v1077 = vpack.c.b16 %v1069, %v1069
        %v1078 = vpack.c.b16 %v1070, %v1070
        %v1079 = vpack.c.b16 %v1071, %v1071
        %v1080 = vpack.c.b16 %v1072, %v1072
        %v1081 = vpack.c.b16 %v1073, %v1073
        %1082 = vrot.lane.b32.xlu0 %v1074, 32
        %v1083 = vpop.permute.xlu0 %1082
        %1084 = vrot.lane.b32.xlu0 %v1075, 32
        %v1085 = vpop.permute.xlu0 %1084
        %1086 = vrot.lane.b32.xlu0 %v1076, 32
        %v1087 = vpop.permute.xlu0 %1086
        %1088 = vrot.lane.b32.xlu0 %v1077, 32
        %v1089 = vpop.permute.xlu0 %1088
        %1090 = vrot.lane.b32.xlu0 %v1078, 32
        %v1091 = vpop.permute.xlu0 %1090
        %1092 = vrot.lane.b32.xlu0 %v1079, 32
        %v1093 = vpop.permute.xlu0 %1092
        %1094 = vrot.lane.b32.xlu0 %v1080, 32
        %v1095 = vpop.permute.xlu0 %1094
        %1096 = vrot.lane.b32.xlu0 %v1081, 32
        %v1097 = vpop.permute.xlu0 %1096
        %v1106 = vunpack.c.l.b16 %v802
        %v1107 = vunpack.c.l.b16 %v803
        %v1108 = vunpack.c.l.b16 %v804
        %v1109 = vunpack.c.l.b16 %v805
        %v1110 = vunpack.c.l.b16 %v806
        %v1111 = vunpack.c.l.b16 %v807
        %v1112 = vunpack.c.l.b16 %v808
        %v1113 = vunpack.c.l.b16 %v809
        %v1114 = vpack.c.b16 %v1106, %v1066
        %v1115 = vpack.c.b16 %v1107, %v1067
        %v1116 = vpack.c.b16 %v1108, %v1068
        %v1117 = vpack.c.b16 %v1109, %v1069
        %v1118 = vpack.c.b16 %v1110, %v1070
        %v1119 = vpack.c.b16 %v1111, %v1071
        %v1120 = vpack.c.b16 %v1112, %v1072
        %v1121 = vpack.c.b16 %v1113, %v1073
        %v1123 = vshrl.u32 %v1114, 16
        %v1125 = vshll.u32 %v1114, 16
        %v1127 = vrot.slane %v1125, 1
        %v1128 = vor.u32 %v1123, %v1127
        %v1130 = vshrl.u32 %v1115, 16
        %v1132 = vshll.u32 %v1115, 16
        %v1134 = vrot.slane %v1132, 1
        %v1135 = vor.u32 %v1130, %v1134
        %v1137 = vshrl.u32 %v1116, 16
        %v1139 = vshll.u32 %v1116, 16
        %v1141 = vrot.slane %v1139, 1
        %v1142 = vor.u32 %v1137, %v1141
        %v1144 = vshrl.u32 %v1117, 16
        %v1146 = vshll.u32 %v1117, 16
        %v1148 = vrot.slane %v1146, 1
        %v1149 = vor.u32 %v1144, %v1148
        %v1151 = vshrl.u32 %v1118, 16
        %v1153 = vshll.u32 %v1118, 16
        %v1155 = vrot.slane %v1153, 1
        %v1156 = vor.u32 %v1151, %v1155
        %v1158 = vshrl.u32 %v1119, 16
        %v1160 = vshll.u32 %v1119, 16
        %v1162 = vrot.slane %v1160, 1
        %v1163 = vor.u32 %v1158, %v1162
        %v1165 = vshrl.u32 %v1120, 16
        %v1167 = vshll.u32 %v1120, 16
        %v1169 = vrot.slane %v1167, 1
        %v1170 = vor.u32 %v1165, %v1169
        %v1172 = vshrl.u32 %v1121, 16
        %v1174 = vshll.u32 %v1121, 16
        %v1176 = vrot.slane %v1174, 1
        %v1177 = vor.u32 %v1172, %v1176
        %1178 = vrot.lane.b32.xlu0 %v1128, 40
        %v1179 = vpop.permute.xlu0 %1178
        %1180 = vrot.lane.b32.xlu0 %v1135, 40
        %v1181 = vpop.permute.xlu0 %1180
        %1182 = vrot.lane.b32.xlu0 %v1142, 40
        %v1183 = vpop.permute.xlu0 %1182
        %1184 = vrot.lane.b32.xlu0 %v1149, 40
        %v1185 = vpop.permute.xlu0 %1184
        %1186 = vrot.lane.b32.xlu0 %v1156, 40
        %v1187 = vpop.permute.xlu0 %1186
        %1188 = vrot.lane.b32.xlu0 %v1163, 40
        %v1189 = vpop.permute.xlu0 %1188
        %1190 = vrot.lane.b32.xlu0 %v1170, 40
        %v1191 = vpop.permute.xlu0 %1190
        %1192 = vrot.lane.b32.xlu0 %v1177, 40
        %v1193 = vpop.permute.xlu0 %1192
        %vm1194 = vcmask 64512
        %v1197 = vsel %vm1194, %v761, %v907
        %v1200 = vsel %vm1194, %v762, %v909
        %v1203 = vsel %vm1194, %v763, %v911
        %v1206 = vsel %vm1194, %v764, %v913
        %v1209 = vsel %vm1194, %v765, %v915
        %v1212 = vsel %vm1194, %v766, %v917
        %v1215 = vsel %vm1194, %v767, %v919
        %v1218 = vsel %vm1194, %v768, %v921
        %vm1219 = vcmask 130048
        %v1221 = vsel %vm1219, %v1197, %v947
        %v1223 = vsel %vm1219, %v1200, %v949
        %v1225 = vsel %vm1219, %v1203, %v951
        %v1227 = vsel %vm1219, %v1206, %v953
        %v1229 = vsel %vm1219, %v1209, %v955
        %v1231 = vsel %vm1219, %v1212, %v957
        %v1233 = vsel %vm1219, %v1215, %v959
        %v1235 = vsel %vm1219, %v1218, %v961
        %vm1236 = vcmask 195584
        %v1238 = vsel %vm1236, %v1221, %v1043
        %v1240 = vsel %vm1236, %v1223, %v1045
        %v1242 = vsel %vm1236, %v1225, %v1047
        %v1244 = vsel %vm1236, %v1227, %v1049
        %v1246 = vsel %vm1236, %v1229, %v1051
        %v1248 = vsel %vm1236, %v1231, %v1053
        %v1250 = vsel %vm1236, %v1233, %v1055
        %v1252 = vsel %vm1236, %v1235, %v1057
        %vm1253 = vcmask 261120
        %v1255 = vsel %vm1253, %v1238, %v1083
        %v1257 = vsel %vm1253, %v1240, %v1085
        %v1259 = vsel %vm1253, %v1242, %v1087
        %v1261 = vsel %vm1253, %v1244, %v1089
        %v1263 = vsel %vm1253, %v1246, %v1091
        %v1265 = vsel %vm1253, %v1248, %v1093
        %v1267 = vsel %vm1253, %v1250, %v1095
        %v1269 = vsel %vm1253, %v1252, %v1097
        %vm1270 = vcmask 326656
        %v1272 = vsel %vm1270, %v1255, %v1179
        %v1274 = vsel %vm1270, %v1257, %v1181
        %v1276 = vsel %vm1270, %v1259, %v1183
        %v1278 = vsel %vm1270, %v1261, %v1185
        %v1280 = vsel %vm1270, %v1263, %v1187
        %v1282 = vsel %vm1270, %v1265, %v1189
        %v1284 = vsel %vm1270, %v1267, %v1191
        %v1286 = vsel %vm1270, %v1269, %v1193
        %v1287 = vld [vmem:[%s3] sm:$0xf]
        %v1288 = vld [vmem:[%s3 + $0x4] sm:$0xf]
        %v1289 = vld [vmem:[%s3 + $0x8] sm:$0xf]
        %v1290 = vld [vmem:[%s3 + $0xc] sm:$0xf]
        %v1291 = vld [vmem:[%s3 + $0x10] sm:$0xf]
        %v1292 = vld [vmem:[%s3 + $0x14] sm:$0xf]
        %v1301 = vunpack.c.l.b16 %v1272
        %v1302 = vunpack.c.l.b16 %v1274
        %v1303 = vunpack.c.l.b16 %v1276
        %v1304 = vunpack.c.l.b16 %v1278
        %v1305 = vunpack.c.l.b16 %v1280
        %v1306 = vunpack.c.l.b16 %v1282
        %v1307 = vunpack.c.l.b16 %v1284
        %v1308 = vunpack.c.l.b16 %v1286
        %v1309 = vpack.c.b16 %v1302, %v1301
        %v1310 = vpack.c.b16 %v1304, %v1303
        %v1311 = vpack.c.b16 %v1306, %v1305
        %v1312 = vpack.c.b16 %v1308, %v1307
        %v1319 = vunpack.c.l.b16 %v1287
        %v1320 = vunpack.c.l.b16 %v1288
        %v1321 = vunpack.c.l.b16 %v1289
        %v1322 = vunpack.c.l.b16 %v1290
        %v1323 = vunpack.c.l.b16 %v1291
        %v1324 = vunpack.c.l.b16 %v1292
        %v1325 = vpack.c.b16 %v1320, %v1319
        %v1326 = vpack.c.b16 %v1322, %v1321
        %v1327 = vpack.c.b16 %v1324, %v1323
        %vm1331 = vcmask 392192
        %v1333 = vsel %vm1331, %v1309, 0
        %v1336 = vsel %vm1331, %v1310, 0
        %v1339 = vsel %vm1331, %v1311, 0
        %v1342 = vsel %vm1331, %v1312, 0
        %1344 = vmatprep.subr.bf16.mxu0 0
        %1345 = vmatpush1.bf16.msra.mxu0 %v1325
        %1346 = vmatprep.subr.bf16.mxu0 0
        %1347 = vmatpush1.bf16.msra.mxu0 %v1326
        %1348 = vmatprep.subr.bf16.mxu0 0
        %1349 = vmatpush1.bf16.msra.mxu0 %v1327
        %1350 = vmatprep.subr.bf16.mxu0 0
        %1351 = vmatpush1.bf16.msra.mxu0 0
        %1352 = vmatprep.subr.bf16.mxu0 0
        %1353 = vmatpush1.bf16.msra.mxu0 0
        %1354 = vmatprep.subr.bf16.mxu0 0
        %1355 = vmatpush1.bf16.msra.mxu0 0
        %1356 = vmatprep.subr.bf16.mxu0 0
        %1357 = vmatpush1.bf16.msra.mxu0 0
        %1358 = vmatprep.subr.bf16.mxu0 0
        %1359 = vmatpush1.bf16.msra.mxu0 0
        %1360 = vmatprep.subr.bf16.mxu0 0
        %1361 = vmatpush1.bf16.msra.mxu0 0
        %1362 = vmatprep.subr.bf16.mxu0 0
        %1363 = vmatpush1.bf16.msra.mxu0 0
        %1364 = vmatprep.subr.bf16.mxu0 0
        %1365 = vmatpush1.bf16.msra.mxu0 0
        %1366 = vmatprep.subr.bf16.mxu0 0
        %1367 = vmatpush1.bf16.msra.mxu0 0
        %1368 = vmatprep.subr.bf16.mxu0 0
        %1369 = vmatpush1.bf16.msra.mxu0 0
        %1370 = vmatprep.subr.bf16.mxu0 0
        %1371 = vmatpush1.bf16.msra.mxu0 0
        %1372 = vmatprep.subr.bf16.mxu0 0
        %1373 = vmatpush1.bf16.msra.mxu0 0
        %1374 = vmatprep.subr.bf16.mxu0 0
        %1375 = vmatpush1.bf16.msra.mxu0 0
        %1376 = vmatprep.mubr.bf16.mxu0 0
        %1377 = vmatmul.mubr.bf16.gmra.mrb[0].mxu0 %v1333
        %v1378 = vpop.f32.mrb[0].mxu0
        %v1379 = vadd.f32 0.0, %v1378
        %v1380 = vpop.f32.mrb[0].mxu0
        %v1381 = vpop.f32.mrb[0].mxu0
        %v1382 = vadd.f32 0.0, %v1381
        %v1383 = vpop.f32.mrb[0].mxu0
        %1384 = vmatprep.mubr.bf16.mxu0 0
        %1385 = vmatmul.mubr.bf16.gmra.mrb[0].mxu0 %v1336
        %v1386 = vpop.f32.mrb[0].mxu0
        %v1387 = vadd.f32 0.0, %v1386
        %v1388 = vpop.f32.mrb[0].mxu0
        %v1389 = vpop.f32.mrb[0].mxu0
        %v1390 = vadd.f32 0.0, %v1389
        %v1391 = vpop.f32.mrb[0].mxu0
        %1392 = vmatprep.mubr.bf16.mxu0 0
        %1393 = vmatmul.mubr.bf16.gmra.mrb[0].mxu0 %v1339
        %v1394 = vpop.f32.mrb[0].mxu0
        %v1395 = vadd.f32 0.0, %v1394
        %v1396 = vpop.f32.mrb[0].mxu0
        %v1397 = vpop.f32.mrb[0].mxu0
        %v1398 = vadd.f32 0.0, %v1397
        %v1399 = vpop.f32.mrb[0].mxu0
        %1400 = vmatprep.mubr.bf16.mxu0 0
        %1401 = vmatmul.mubr.bf16.gmra.mrb[0].mxu0 %v1342
        %v1402 = vpop.f32.mrb[0].mxu0
        %v1403 = vadd.f32 0.0, %v1402
        %v1404 = vpop.f32.mrb[0].mxu0
        %v1405 = vpop.f32.mrb[0].mxu0
        %v1406 = vadd.f32 0.0, %v1405
        %v1407 = vpop.f32.mrb[0].mxu0
        %1408 = vdwg.mxu0
        %1409 = vst.msk [vmem:[%s273] sm:$0xff] %vm1194, %v1379
        %1410 = vst.msk [vmem:[%s273 + $0x8] sm:$0xff] %vm1194, %v1382
        %1411 = vst.msk [vmem:[%s273 + $0x10] sm:$0xff] %vm1194, %v1387
        %1412 = vst.msk [vmem:[%s273 + $0x18] sm:$0xff] %vm1194, %v1390
        %1413 = vst.msk [vmem:[%s273 + $0x20] sm:$0xff] %vm1194, %v1395
        %1414 = vst.msk [vmem:[%s273 + $0x28] sm:$0xff] %vm1194, %v1398
        %1415 = vst.msk [vmem:[%s273 + $0x30] sm:$0xff] %vm1194, %v1403
        %1416 = vst.msk [vmem:[%s273 + $0x38] sm:$0xff] %vm1194, %v1406
        %v1417 = vld [vmem:[%s660] sm:$0xf]
        %v1418 = vld [vmem:[%s660 + $0x4] sm:$0x1]
        %v1419 = vld [vmem:[%s660 + $0x10] sm:$0xf]
        %v1420 = vld [vmem:[%s660 + $0x14] sm:$0x1]
        %v1421 = vld [vmem:[%s660 + $0x20] sm:$0xf]
        %v1422 = vld [vmem:[%s660 + $0x24] sm:$0x1]
        %v1423 = vld [vmem:[%s660 + $0x30] sm:$0xf]
        %v1424 = vld [vmem:[%s660 + $0x34] sm:$0x1]
        %v1425 = vld [vmem:[%s660 + $0x40] sm:$0xf]
        %v1426 = vld [vmem:[%s660 + $0x44] sm:$0x1]
        %v1427 = vld [vmem:[%s660 + $0x50] sm:$0xf]
        %v1428 = vld [vmem:[%s660 + $0x54] sm:$0x1]
        %v1429 = vld [vmem:[%s660 + $0x60] sm:$0xf]
        %v1430 = vld [vmem:[%s660 + $0x64] sm:$0x1]
        %v1431 = vld [vmem:[%s660 + $0x70] sm:$0xf]
        %v1432 = vld [vmem:[%s660 + $0x74] sm:$0x1]
        %vm1433 = vsmask.f32 3328
        %vm1434 = vsmask.f32 7440
        %vm1435 = vmor %vm1433, %vm1434
        %v1437 = vshrl.u32 %v1417, 16
        %v1439 = vrot.slane %v1437, 4
        %v1440 = vshll.u32 %v1417, 16
        %v1442 = vrot.slane %v1440, 5
        %v1443 = vor.u32 %v1439, %v1442
        %v1444 = vrot.slane %v1443, 4
        %v1446 = vshll.u32 %v1418, 16
        %v1448 = vrot.slane %v1446, 5
        %v1449 = vsel %vm1435, %v1444, %v1448
        %v1451 = vshrl.u32 %v1419, 16
        %v1453 = vrot.slane %v1451, 4
        %v1454 = vshll.u32 %v1419, 16
        %v1456 = vrot.slane %v1454, 5
        %v1457 = vor.u32 %v1453, %v1456
        %v1458 = vrot.slane %v1457, 4
        %v1460 = vshll.u32 %v1420, 16
        %v1462 = vrot.slane %v1460, 5
        %v1463 = vsel %vm1435, %v1458, %v1462
        %v1465 = vshrl.u32 %v1421, 16
        %v1467 = vrot.slane %v1465, 4
        %v1468 = vshll.u32 %v1421, 16
        %v1470 = vrot.slane %v1468, 5
        %v1471 = vor.u32 %v1467, %v1470
        %v1472 = vrot.slane %v1471, 4
        %v1474 = vshll.u32 %v1422, 16
        %v1476 = vrot.slane %v1474, 5
        %v1477 = vsel %vm1435, %v1472, %v1476
        %v1479 = vshrl.u32 %v1423, 16
        %v1481 = vrot.slane %v1479, 4
        %v1482 = vshll.u32 %v1423, 16
        %v1484 = vrot.slane %v1482, 5
        %v1485 = vor.u32 %v1481, %v1484
        %v1486 = vrot.slane %v1485, 4
        %v1488 = vshll.u32 %v1424, 16
        %v1490 = vrot.slane %v1488, 5
        %v1491 = vsel %vm1435, %v1486, %v1490
        %v1493 = vshrl.u32 %v1425, 16
        %v1495 = vrot.slane %v1493, 4
        %v1496 = vshll.u32 %v1425, 16
        %v1498 = vrot.slane %v1496, 5
        %v1499 = vor.u32 %v1495, %v1498
        %v1500 = vrot.slane %v1499, 4
        %v1502 = vshll.u32 %v1426, 16
        %v1504 = vrot.slane %v1502, 5
        %v1505 = vsel %vm1435, %v1500, %v1504
        %v1507 = vshrl.u32 %v1427, 16
        %v1509 = vrot.slane %v1507, 4
        %v1510 = vshll.u32 %v1427, 16
        %v1512 = vrot.slane %v1510, 5
        %v1513 = vor.u32 %v1509, %v1512
        %v1514 = vrot.slane %v1513, 4
        %v1516 = vshll.u32 %v1428, 16
        %v1518 = vrot.slane %v1516, 5
        %v1519 = vsel %vm1435, %v1514, %v1518
        %v1521 = vshrl.u32 %v1429, 16
        %v1523 = vrot.slane %v1521, 4
        %v1524 = vshll.u32 %v1429, 16
        %v1526 = vrot.slane %v1524, 5
        %v1527 = vor.u32 %v1523, %v1526
        %v1528 = vrot.slane %v1527, 4
        %v1530 = vshll.u32 %v1430, 16
        %v1532 = vrot.slane %v1530, 5
        %v1533 = vsel %vm1435, %v1528, %v1532
        %v1535 = vshrl.u32 %v1431, 16
        %v1537 = vrot.slane %v1535, 4
        %v1538 = vshll.u32 %v1431, 16
        %v1540 = vrot.slane %v1538, 5
        %v1541 = vor.u32 %v1537, %v1540
        %v1542 = vrot.slane %v1541, 4
        %v1544 = vshll.u32 %v1432, 16
        %v1546 = vrot.slane %v1544, 5
        %v1547 = vsel %vm1435, %v1542, %v1546
        %v1548 = vld [vmem:[%s4] sm:$0xf]
        %v1549 = vunpack.c.l.b16 %v1449
        %v1550 = vunpack.c.l.b16 %v1463
        %v1551 = vunpack.c.l.b16 %v1477
        %v1552 = vunpack.c.l.b16 %v1491
        %v1553 = vunpack.c.l.b16 %v1505
        %v1554 = vunpack.c.l.b16 %v1519
        %v1555 = vunpack.c.l.b16 %v1533
        %v1556 = vunpack.c.l.b16 %v1547
        %v1557 = vpack.c.b16 %v1550, %v1549
        %v1558 = vpack.c.b16 %v1552, %v1551
        %v1559 = vpack.c.b16 %v1554, %v1553
        %v1560 = vpack.c.b16 %v1556, %v1555
        %v1562 = vsel %vm1194, %v1557, 0
        %v1565 = vsel %vm1194, %v1558, 0
        %v1568 = vsel %vm1194, %v1559, 0
        %v1571 = vsel %vm1194, %v1560, 0
        %vm1573 = vcmask 1043456
        %v1575 = vsel %vm1573, %v1548, 0
        %1577 = vmatprep.subr.bf16.mxu0 0
        %1578 = vmatpush1.bf16.msra.mxu0 %v1575
        %1579 = vmatprep.subr.bf16.mxu0 0
        %1580 = vmatpush1.bf16.msra.mxu0 0
        %1581 = vmatprep.subr.bf16.mxu0 0
        %1582 = vmatpush1.bf16.msra.mxu0 0
        %1583 = vmatprep.subr.bf16.mxu0 0
        %1584 = vmatpush1.bf16.msra.mxu0 0
        %1585 = vmatprep.subr.bf16.mxu0 0
        %1586 = vmatpush1.bf16.msra.mxu0 0
        %1587 = vmatprep.subr.bf16.mxu0 0
        %1588 = vmatpush1.bf16.msra.mxu0 0
        %1589 = vmatprep.subr.bf16.mxu0 0
        %1590 = vmatpush1.bf16.msra.mxu0 0
        %1591 = vmatprep.subr.bf16.mxu0 0
        %1592 = vmatpush1.bf16.msra.mxu0 0
        %1593 = vmatprep.subr.bf16.mxu0 0
        %1594 = vmatpush1.bf16.msra.mxu0 0
        %1595 = vmatprep.subr.bf16.mxu0 0
        %1596 = vmatpush1.bf16.msra.mxu0 0
        %1597 = vmatprep.subr.bf16.mxu0 0
        %1598 = vmatpush1.bf16.msra.mxu0 0
        %1599 = vmatprep.subr.bf16.mxu0 0
        %1600 = vmatpush1.bf16.msra.mxu0 0
        %1601 = vmatprep.subr.bf16.mxu0 0
        %1602 = vmatpush1.bf16.msra.mxu0 0
        %1603 = vmatprep.subr.bf16.mxu0 0
        %1604 = vmatpush1.bf16.msra.mxu0 0
        %1605 = vmatprep.subr.bf16.mxu0 0
        %1606 = vmatpush1.bf16.msra.mxu0 0
        %1607 = vmatprep.subr.bf16.mxu0 0
        %1608 = vmatpush1.bf16.msra.mxu0 0
        %1609 = vmatprep.mubr.bf16.mxu0 0
        %1610 = vmatmul.mubr.bf16.gmra.mrb[0].mxu0 %v1562
        %v1611 = vpop.f32.mrb[0].mxu0
        %v1612 = vadd.f32 0.0, %v1611
        %v1613 = vpop.f32.mrb[0].mxu0
        %v1614 = vpop.f32.mrb[0].mxu0
        %v1615 = vadd.f32 0.0, %v1614
        %v1616 = vpop.f32.mrb[0].mxu0
        %1617 = vmatprep.mubr.bf16.mxu0 0
        %1618 = vmatmul.mubr.bf16.gmra.mrb[0].mxu0 %v1565
        %v1619 = vpop.f32.mrb[0].mxu0
        %v1620 = vadd.f32 0.0, %v1619
        %v1621 = vpop.f32.mrb[0].mxu0
        %v1622 = vpop.f32.mrb[0].mxu0
        %v1623 = vadd.f32 0.0, %v1622
        %v1624 = vpop.f32.mrb[0].mxu0
        %1625 = vmatprep.mubr.bf16.mxu0 0
        %1626 = vmatmul.mubr.bf16.gmra.mrb[0].mxu0 %v1568
        %v1627 = vpop.f32.mrb[0].mxu0
        %v1628 = vadd.f32 0.0, %v1627
        %v1629 = vpop.f32.mrb[0].mxu0
        %v1630 = vpop.f32.mrb[0].mxu0
        %v1631 = vadd.f32 0.0, %v1630
        %v1632 = vpop.f32.mrb[0].mxu0
        %1633 = vmatprep.mubr.bf16.mxu0 0
        %1634 = vmatmul.mubr.bf16.gmra.mrb[0].mxu0 %v1571
        %v1635 = vpop.f32.mrb[0].mxu0
        %v1636 = vadd.f32 0.0, %v1635
        %v1637 = vpop.f32.mrb[0].mxu0
        %v1638 = vpop.f32.mrb[0].mxu0
        %v1639 = vadd.f32 0.0, %v1638
        %v1640 = vpop.f32.mrb[0].mxu0
        %1641 = vdwg.mxu0
        %1642 = vst.msk [vmem:[%s280] sm:$0xff] %vm1194, %v1612
        %1643 = vst.msk [vmem:[%s280 + $0x8] sm:$0xff] %vm1194, %v1615
        %1644 = vst.msk [vmem:[%s280 + $0x10] sm:$0xff] %vm1194, %v1620
        %1645 = vst.msk [vmem:[%s280 + $0x18] sm:$0xff] %vm1194, %v1623
        %1646 = vst.msk [vmem:[%s280 + $0x20] sm:$0xff] %vm1194, %v1628
        %1647 = vst.msk [vmem:[%s280 + $0x28] sm:$0xff] %vm1194, %v1631
        %1648 = vst.msk [vmem:[%s280 + $0x30] sm:$0xff] %vm1194, %v1636
        %1649 = vst.msk [vmem:[%s280 + $0x38] sm:$0xff] %vm1194, %v1639
        %s1650 = sand.u32 %s145, 1
        %s1651 = scalar_lea.sflag [#allocation5], %s1650
        %s1652 = sand.u32 %s145, 1
        %s1653 = smul.addr %s1652, 64
        %s1654 = scalar_lea.vmem [#allocation6], %s1653
        %s1655 = sand.u32 %s171, 1
        %s1656 = scalar_lea.sflag [#allocation8], %s1655
        %s1657 = sand.u32 %s171, 1
        %s1658 = smul.addr %s1657, 64
        %s1659 = scalar_lea.vmem [#allocation7], %s1658
        // Predicated region
        $region45: #{tpu_custom_call.1} parent=39 // pred_check
          %p1660 = pneg %p155
        $region46: #{tpu_custom_call.1} parent=39 // pred_check_branch
          %1662 = sbr.rel (%p1660) target = $region48
        $region47: #{tpu_custom_call.1} parent=39 // pred_region
          %s1664 = ssub.s32 1024, 1024
          %1665 = vsyncadd %s1651, %s1664
          %s1666 = smul.addr %s27, 8
          %s1667 = smul.addr %s1666, 128
          %s1668 = scalar_lea.hbm %s5, %s1667
          %s1669 = sshll.u32 %s1654, 4
          %s1670 = int_to_ptr.vmem [resolvable:$true] %s1669
          %1675 = dma.vmem_to_hbm [thread:$0]  %s1670, 1024, %s1668, %s1651, 128, 128, 8
        $region48: #{tpu_custom_call.1} parent=39 // pred_fallthru
          _
        // Predicated region
        $region49: #{tpu_custom_call.1} parent=39 // pred_check
          %p1676 = pneg %p181
        $region50: #{tpu_custom_call.1} parent=39 // pred_check_branch
          %1678 = sbr.rel (%p1676) target = $region52
        $region51: #{tpu_custom_call.1} parent=39 // pred_region
          %s1680 = ssub.s32 1024, 1024
          %1681 = vsyncadd %s1656, %s1680
          %s1682 = smul.addr %s27, 8
          %s1683 = smul.addr %s1682, 128
          %s1684 = scalar_lea.hbm %s6, %s1683
          %s1685 = sshll.u32 %s1659, 4
          %s1686 = int_to_ptr.vmem [resolvable:$true] %s1685
          %1691 = dma.vmem_to_hbm [thread:$0]  %s1686, 1024, %s1684, %s1656, 128, 128, 8
        $region52: #{tpu_custom_call.1} parent=39 // pred_fallthru
          _
      $region40: #{tpu_custom_call.1} parent=5 // pred_fallthru
        _
      %p1692 = scmp.le.s32.totalorder 2, %s22
      // Predicated region
      $region53: #{tpu_custom_call.1} parent=5 // pred_check
        %p1693 = pneg %p1692
      $region54: #{tpu_custom_call.1} parent=5 // pred_check_branch
        %1695 = sbr.rel (%p1693) target = $region56
      $region55: #{tpu_custom_call.1} parent=5 // pred_region
        %s1696 = ssub.s32 %s22, 2
        // Predicated region
        $region57: #{tpu_custom_call.1} parent=55 // pred_check
          %p1697 = pneg %p161
        $region58: #{tpu_custom_call.1} parent=55 // pred_check_branch
          %1699 = sbr.rel (%p1697) target = $region60
        $region59: #{tpu_custom_call.1} parent=55 // pred_region
          %s1700 = sand.u32 %s146, 1
          %s1701 = scalar_lea.sflag [#allocation5], %s1700
          %s1702 = sand.u32 %s146, 1
          %s1703 = smul.addr %s1702, 64
          %s1704 = scalar_lea.vmem [#allocation6], %s1703
          %1705 = dma.done %s1701, 1024
        $region60: #{tpu_custom_call.1} parent=55 // pred_fallthru
          _
        // Predicated region
        $region61: #{tpu_custom_call.1} parent=55 // pred_check
          %p1706 = pneg %p187
        $region62: #{tpu_custom_call.1} parent=55 // pred_check_branch
          %1708 = sbr.rel (%p1706) target = $region64
        $region63: #{tpu_custom_call.1} parent=55 // pred_region
          %s1709 = sand.u32 %s172, 1
          %s1710 = scalar_lea.sflag [#allocation8], %s1709
          %s1711 = sand.u32 %s172, 1
          %s1712 = smul.addr %s1711, 64
          %s1713 = scalar_lea.vmem [#allocation7], %s1712
          %1714 = dma.done %s1710, 1024
        $region64: #{tpu_custom_call.1} parent=55 // pred_fallthru
          _
      $region56: #{tpu_custom_call.1} parent=5 // pred_fallthru
        _
    $region6: #{tpu_custom_call.1} parent=1 // loop_footer
      %s26 = sadd.s32 1, %s22
    $region7: #{tpu_custom_call.1} parent=1 // loop_footer_branch
      %21 = sbr.rel target = $region3
    $region8: #{tpu_custom_call.1} parent=1 // loop_exit
      _
    %1715 = vsyncpa [#allocation4], 1
    %s1716 = scalar_lea.sflag [#allocation4], 1
    %1717 = vsyncpa %s1716, 1
    %1718 = vsyncpa [#allocation5], 1
    %s1719 = scalar_lea.sflag [#allocation5], 1
    %1720 = vsyncpa %s1719, 1
    %1721 = vsyncpa [#allocation8], 1
    %s1722 = scalar_lea.sflag [#allocation8], 1
    %1723 = vsyncpa %s1722, 1

</llo_original>
